<compile_context>
chip_gen: v7x
topology: tpu7x:2x2x1
jax: 0.10.0
libtpu: 0.0.40
codegen_flags: <defaults>
</compile_context>

<pallas_src>
import math
from functools import partial

import jax
import jax.numpy as jnp
from jax.experimental import pallas as pl
from jax.experimental.pallas import tpu as pltpu


VMEM_LIMIT = 32 * 1024 * 1024  # per-step scoped VMEM budget (fits v5e/v6e/v7x)


# ----------------------------- helpers ---------------------------------------

def _round_up(n, m):
    return ((n + m - 1) // m) * m


def _pick_tile(dim, preferred, align):
    """Largest tile <= preferred that divides dim and is a multiple of align.
    Falls back to the full dim (always a legal block size)."""
    if dim <= preferred:
        return dim
    t = (preferred // align) * align
    while t >= align:
        if dim % t == 0:
            return t
        t -= align
    return dim


def _heads_per_step(num_heads, head_dim):
    """Smallest head group whose lane width (g*hd) is a 128-multiple; else all heads."""
    for g in range(1, num_heads + 1):
        if num_heads % g == 0 and (g * head_dim) % 128 == 0:
            return g
    return num_heads


# ----------------------------- Pallas kernels --------------------------------

def _ln_matmul_kernel(x_ref, g_ref, b_ref, w_ref, bias_ref, o_ref, *, activation):
    """Fused LayerNorm (full feature dim) -> matmul -> bias [-> GELU]. bf16 out."""
    x = x_ref[...].astype(jnp.float32)
    mean = jnp.mean(x, axis=-1, keepdims=True)
    var = jnp.mean((x - mean) ** 2, axis=-1, keepdims=True)
    h = (x - mean) * jax.lax.rsqrt(var + 1e-5)
    h = h * g_ref[...] + b_ref[...]
    y = jnp.dot(h.astype(jnp.bfloat16), w_ref[...],
                preferred_element_type=jnp.float32)
    y = y + bias_ref[...]
    if activation == "gelu":
        # exact GELU (torch nn.GELU default): 0.5*x*(1+erf(x/sqrt(2)))
        y = 0.5 * y * (1.0 + jax.lax.erf(y * jnp.float32(1.0 / math.sqrt(2.0))))
    o_ref[...] = y.astype(o_ref.dtype)


def ln_matmul(x2d, gamma, beta, w, b, activation=None):
    """LayerNorm(x) @ W + b [+GELU], f32 in, bf16 out."""
    M, K = x2d.shape
    Kw, N = w.shape
    assert K == Kw
    tm = _pick_tile(M, 256, 8)
    tn = _pick_tile(N, 1024, 128)   # wide N tile -> LN stats computed once per row tile
    grid = (M // tm, N // tn)
    return pl.pallas_call(
        partial(_ln_matmul_kernel, activation=activation),
        out_shape=jax.ShapeDtypeStruct((M, N), jnp.bfloat16),
        grid=grid,
        in_specs=[
            pl.BlockSpec((tm, K), lambda i, j: (i, 0)),
            pl.BlockSpec((1, K), lambda i, j: (0, 0)),
            pl.BlockSpec((1, K), lambda i, j: (0, 0)),
            pl.BlockSpec((K, tn), lambda i, j: (0, j)),
            pl.BlockSpec((1, tn), lambda i, j: (0, j)),
        ],
        out_specs=pl.BlockSpec((tm, tn), lambda i, j: (i, j)),
        compiler_params=pltpu.CompilerParams(
            dimension_semantics=("parallel", "parallel"),
            vmem_limit_bytes=VMEM_LIMIT),
    )(x2d, gamma.reshape(1, K), beta.reshape(1, K), w, b.reshape(1, N))


def _matmul_res_kernel(x_ref, w_ref, bias_ref, res_ref, o_ref, acc_ref):
    """Tiled bf16 matmul with f32 accumulator; bias + residual fused in epilogue."""
    @pl.when(pl.program_id(2) == 0)
    def _():
        acc_ref[...] = jnp.zeros_like(acc_ref)

    acc_ref[...] += jnp.dot(x_ref[...], w_ref[...],
                            preferred_element_type=jnp.float32)

    @pl.when(pl.program_id(2) == pl.num_programs(2) - 1)
    def _():
        o_ref[...] = (acc_ref[...] + bias_ref[...] + res_ref[...]).astype(o_ref.dtype)


def matmul_residual(x2d, w, b, residual):
    """x @ W + b + residual.  x, W bf16; residual/output f32 (residual stream)."""
    M, K = x2d.shape
    Kw, N = w.shape
    assert K == Kw and residual.shape == (M, N)
    tm = _pick_tile(M, 256, 8)
    tn = _pick_tile(N, 512, 128)
    tk = _pick_tile(K, 512, 128)
    grid = (M // tm, N // tn, K // tk)
    return pl.pallas_call(
        _matmul_res_kernel,
        out_shape=jax.ShapeDtypeStruct((M, N), jnp.float32),
        grid=grid,
        in_specs=[
            pl.BlockSpec((tm, tk), lambda i, j, k: (i, k)),
            pl.BlockSpec((tk, tn), lambda i, j, k: (k, j)),
            pl.BlockSpec((1, tn), lambda i, j, k: (0, j)),
            pl.BlockSpec((tm, tn), lambda i, j, k: (i, j)),
        ],
        out_specs=pl.BlockSpec((tm, tn), lambda i, j, k: (i, j)),
        scratch_shapes=[pltpu.VMEM((tm, tn), jnp.float32)],
        compiler_params=pltpu.CompilerParams(
            dimension_semantics=("parallel", "parallel", "arbitrary"),
            vmem_limit_bytes=VMEM_LIMIT),
    )(x2d, w, b.reshape(1, N), residual)


def _attention_kernel(qkv_ref, o_ref, *, heads_per_step, scale):
    """Causal self-attention for one (batch, head-group) grid step.

    qkv_ref block: (3, 1, g, T, hd) bf16 — head group selected by the BlockSpec.
    o_ref   block: (1, T, g*hd) bf16 — lane-dense (>=128 lanes or full C) store.
    """
    T = qkv_ref.shape[3]
    row = jax.lax.broadcasted_iota(jnp.int32, (T, T), 0)
    col = jax.lax.broadcasted_iota(jnp.int32, (T, T), 1)
    causal = col <= row

    outs = []
    for h in range(heads_per_step):          # small static loop within the group
        # fold 1/sqrt(hd) into q (T*hd muls instead of T*T)
        q = (qkv_ref[0, 0, h].astype(jnp.float32) * scale).astype(jnp.bfloat16)
        k = qkv_ref[1, 0, h]                 # (T, hd) bf16
        v = qkv_ref[2, 0, h]
        # scores: contract on head_dim ('td,sd->ts') on the MXU, f32 accumulate
        att = jax.lax.dot_general(q, k, (((1,), (1,)), ((), ())),
                                  preferred_element_type=jnp.float32)
        att = jnp.where(causal, att, jnp.float32(-1e30))
        att = att - jnp.max(att, axis=-1, keepdims=True)
        p = jnp.exp(att)
        p = p * pl.reciprocal(jnp.sum(p, axis=-1, keepdims=True), approx=True)
        outs.append(jnp.dot(p.astype(jnp.bfloat16), v,
                            preferred_element_type=jnp.float32))

    # one lane-dense write covering all heads of this group
    o_ref[0] = jnp.concatenate(outs, axis=-1).astype(o_ref.dtype)


def causal_attention(qkv_t):
    """qkv_t: (3, B, H, T, hd) bf16 -> (B, T, C) bf16."""
    three, B, H, T, hd = qkv_t.shape
    assert three == 3
    C = H * hd
    scale = 1.0 / math.sqrt(hd)
    g = _heads_per_step(H, hd)
    return pl.pallas_call(
        partial(_attention_kernel, heads_per_step=g, scale=scale),
        out_shape=jax.ShapeDtypeStruct((B, T, C), jnp.bfloat16),
        grid=(B, H // g),
        in_specs=[pl.BlockSpec((3, 1, g, T, hd), lambda b, j: (0, b, j, 0, 0))],
        out_specs=pl.BlockSpec((1, T, g * hd), lambda b, j: (b, 0, j)),
        compiler_params=pltpu.CompilerParams(
            dimension_semantics=("parallel", "parallel"),
            vmem_limit_bytes=VMEM_LIMIT),
    )(qkv_t)


def _layernorm_kernel(x_ref, g_ref, b_ref, o_ref):
    x = x_ref[...].astype(jnp.float32)
    mean = jnp.mean(x, axis=-1, keepdims=True)
    var = jnp.mean((x - mean) ** 2, axis=-1, keepdims=True)
    y = (x - mean) * jax.lax.rsqrt(var + 1e-5)
    o_ref[...] = (y * g_ref[...] + b_ref[...]).astype(o_ref.dtype)


def layernorm(x2d, gamma, beta):
    M, C = x2d.shape
    tm = _pick_tile(M, 512, 8)
    return pl.pallas_call(
        _layernorm_kernel,
        out_shape=jax.ShapeDtypeStruct((M, C), x2d.dtype),
        grid=(M // tm,),
        in_specs=[
            pl.BlockSpec((tm, C), lambda i: (i, 0)),
            pl.BlockSpec((1, C), lambda i: (0, 0)),
            pl.BlockSpec((1, C), lambda i: (0, 0)),
        ],
        out_specs=pl.BlockSpec((tm, C), lambda i: (i, 0)),
        compiler_params=pltpu.CompilerParams(
            dimension_semantics=("parallel",),
            vmem_limit_bytes=VMEM_LIMIT),
    )(x2d, gamma.reshape(1, C), beta.reshape(1, C))


# ------------------------------ model glue -----------------------------------

def init_params(key, num_layers, embed_dim):
    C = embed_dim
    params = {"blocks": [],
              "ln_f_g": jnp.ones((C,), jnp.float32),
              "ln_f_b": jnp.zeros((C,), jnp.float32)}
    for _ in range(num_layers):
        keys = jax.random.split(key, 7)
        key = keys[0]
        wq = 0.02 * jax.random.normal(keys[1], (C, C), jnp.float32)
        wk = 0.02 * jax.random.normal(keys[2], (C, C), jnp.float32)
        wv = 0.02 * jax.random.normal(keys[3], (C, C), jnp.float32)
        blk = {
            "ln1_g": jnp.ones((C,), jnp.float32),
            "ln1_b": jnp.zeros((C,), jnp.float32),
            # fused [Wq | Wk | Wv] -> (C, 3C); bf16 weights for the MXU
            "w_qkv": jnp.concatenate([wq, wk, wv], axis=1).astype(jnp.bfloat16),
            "b_qkv": jnp.zeros((3 * C,), jnp.float32),
            "wp": (0.02 * jax.random.normal(keys[4], (C, C), jnp.float32)).astype(jnp.bfloat16),
            "bp": jnp.zeros((C,), jnp.float32),
            "ln2_g": jnp.ones((C,), jnp.float32),
            "ln2_b": jnp.zeros((C,), jnp.float32),
            "w1": (0.02 * jax.random.normal(keys[5], (C, 4 * C), jnp.float32)).astype(jnp.bfloat16),
            "b1": jnp.zeros((4 * C,), jnp.float32),
            "w2": (0.02 * jax.random.normal(keys[6], (4 * C, C), jnp.float32)).astype(jnp.bfloat16),
            "b2": jnp.zeros((C,), jnp.float32),
        }
        params["blocks"].append(blk)
    return params


def transformer_forward(sequences, params, num_heads):
    B, T, C = sequences.shape
    H = num_heads
    hd = C // H

    # pad the token axis so all row tiles are (8,128)-aligned (sliced off at the end)
    t_align = 128 if T >= 128 else 8
    T_pad = _round_up(T, t_align)
    x = sequences
    if T_pad != T:
        x = jnp.pad(x, ((0, 0), (0, T_pad - T), (0, 0)))

    x2 = x.reshape(B * T_pad, C)            # embed dropout = identity (eval); f32 residual stream

    for blk in params["blocks"]:
        # --- self-attention branch: LN1 fused into the fused QKV projection (bf16 out) ---
        qkv = ln_matmul(x2, blk["ln1_g"], blk["ln1_b"], blk["w_qkv"], blk["b_qkv"])
        # head-major layout so the attention BlockSpec selects heads (cheap bf16 shuffle)
        qkv_t = jnp.transpose(qkv.reshape(B, T_pad, 3, H, hd), (2, 0, 3, 1, 4))
        y = causal_attention(qkv_t)                     # (B, T_pad, C) bf16, lane-dense
        y2 = y.reshape(B * T_pad, C)                    # free reshape
        # output projection with residual add fused in the kernel epilogue (f32 stream)
        x2 = matmul_residual(y2, blk["wp"], blk["bp"], x2)

        # --- MLP branch: LN2 fused into fc1 (+GELU, bf16 out); fc2 fuses the residual ---
        m = ln_matmul(x2, blk["ln2_g"], blk["ln2_b"], blk["w1"], blk["b1"],
                      activation="gelu")
        x2 = matmul_residual(m, blk["w2"], blk["b2"], x2)

    out = layernorm(x2, params["ln_f_g"], params["ln_f_b"])
    out = out.reshape(B, T_pad, C)
    if T_pad != T:
        out = out[:, :T, :]
    return out


# --------------------------------- main ---------------------------------------

if __name__ == "__main__":
    # small config consistent with the module: causal attention, no kv_cache
    B, T, C = 2, 8, 32          # batch, max_tokens (=seq), embed_dim
    num_heads = 4
    num_layers = 2

    key = jax.random.PRNGKey(0)
    k_x, k_p = jax.random.split(key)
    sequences = jax.random.normal(k_x, (B, T, C), jnp.float32)
    params = init_params(k_p, num_layers, C)

    fwd = jax.jit(partial(transformer_forward, num_heads=num_heads))
    out = fwd(sequences, params)
    jax.block_until_ready(out)

    assert out.shape == (B, T, C) and out.dtype == jnp.float32
    assert bool(jnp.all(jnp.isfinite(out)))
    print("KERNEL_OK")
</pallas_src>

<mosaic_0001>
module attributes {stable_mosaic.version = 11 : i64} {
  func.func @_attention_kernel(%arg0: i32, %arg1: i32, %arg2: memref<3x1x4x8x8xbf16, #tpu.memory_space<vmem>>, %arg3: memref<1x8x32xbf16, #tpu.memory_space<vmem>>) attributes {dimension_semantics = [#tpu.dimension_semantics<parallel>, #tpu.dimension_semantics<parallel>], iteration_bounds = array<i64: 2, 1>, scalar_prefetch = 0 : i64, scratch_operands = 0 : i64, tpu.core_type = #tpu.core_type<tc>, window_params = [{transform_indices = @transform_0, window_bounds = array<i64: 3, 1, 4, 8, 8>}, {transform_indices = @transform_1, window_bounds = array<i64: 1, 8, 32>}]} {
    %0 = tpu.iota {dimensions = array<i32: 0>} : vector<8x8xi32>
    %1 = tpu.iota {dimensions = array<i32: 1>} : vector<8x8xi32>
    %2 = arith.cmpi sle, %1, %0 : vector<8x8xi32>
    %c0 = arith.constant 0 : index
    %c0_0 = arith.constant 0 : index
    %c0_1 = arith.constant 0 : index
    %c0_2 = arith.constant 0 : index
    %c0_3 = arith.constant 0 : index
    %3 = vector.load %arg2[%c0, %c0_0, %c0_1, %c0_2, %c0_3] : memref<3x1x4x8x8xbf16, #tpu.memory_space<vmem>>, vector<1x1x1x8x8xbf16>
    %4 = vector.shape_cast %3 : vector<1x1x1x8x8xbf16> to vector<8x8xbf16>
    %5 = arith.extf %4 : vector<8x8xbf16> to vector<8x8xf32>
    %cst = arith.constant 0.353553385 : f32
    %6 = vector.broadcast %cst : f32 to vector<8x8xf32>
    %7 = arith.mulf %5, %6 : vector<8x8xf32>
    %8 = arith.truncf %7 : vector<8x8xf32> to vector<8x8xbf16>
    %c1 = arith.constant 1 : index
    %c0_4 = arith.constant 0 : index
    %c0_5 = arith.constant 0 : index
    %c0_6 = arith.constant 0 : index
    %c0_7 = arith.constant 0 : index
    %9 = vector.load %arg2[%c1, %c0_4, %c0_5, %c0_6, %c0_7] : memref<3x1x4x8x8xbf16, #tpu.memory_space<vmem>>, vector<1x1x1x8x8xbf16>
    %10 = vector.shape_cast %9 : vector<1x1x1x8x8xbf16> to vector<8x8xbf16>
    %c2 = arith.constant 2 : index
    %c0_8 = arith.constant 0 : index
    %c0_9 = arith.constant 0 : index
    %c0_10 = arith.constant 0 : index
    %c0_11 = arith.constant 0 : index
    %11 = vector.load %arg2[%c2, %c0_8, %c0_9, %c0_10, %c0_11] : memref<3x1x4x8x8xbf16, #tpu.memory_space<vmem>>, vector<1x1x1x8x8xbf16>
    %12 = vector.shape_cast %11 : vector<1x1x1x8x8xbf16> to vector<8x8xbf16>
    %cst_12 = arith.constant dense<0.000000e+00> : vector<8x8xf32>
    %13 = tpu.matmul %8, %10, %cst_12 {dimension_numbers = #tpu.dot_dimension_numbers<[1], [1], [0], [0], [0, 0, 1, 0], [], []>} : vector<8x8xbf16>, vector<8x8xbf16>, vector<8x8xf32> -> vector<8x8xf32>
    %cst_13 = arith.constant -1.000000e+30 : f32
    %14 = vector.broadcast %cst_13 : f32 to vector<8x8xf32>
    %15 = arith.select %2, %13, %14 : vector<8x8xi1>, vector<8x8xf32>
    %cst_14 = arith.constant dense<0xFF800000> : vector<8xf32>
    %16 = vector.multi_reduction <maximumf>, %15, %cst_14 [1] : vector<8x8xf32> to vector<8xf32>
    %17 = vector.shape_cast %16 : vector<8xf32> to vector<8x1xf32>
    %18 = vector.broadcast %17 : vector<8x1xf32> to vector<8x8xf32>
    %19 = arith.subf %15, %18 : vector<8x8xf32>
    %20 = math.exp %19 : vector<8x8xf32>
    %cst_15 = arith.constant dense<0.000000e+00> : vector<8xf32>
    %21 = vector.multi_reduction <add>, %20, %cst_15 [1] : vector<8x8xf32> to vector<8xf32>
    %22 = vector.shape_cast %21 : vector<8xf32> to vector<8x1xf32>
    %23 = tpu.reciprocal %22 {approx = true} : vector<8x1xf32> -> vector<8x1xf32>
    %24 = vector.broadcast %23 : vector<8x1xf32> to vector<8x8xf32>
    %25 = arith.mulf %20, %24 : vector<8x8xf32>
    %26 = arith.truncf %25 : vector<8x8xf32> to vector<8x8xbf16>
    %cst_16 = arith.constant dense<0.000000e+00> : vector<8x8xf32>
    %27 = tpu.matmul %26, %12, %cst_16 {dimension_numbers = #tpu.dot_dimension_numbers<[1], [0], [0], [1], [0, 0, 1, 1], [], []>} : vector<8x8xbf16>, vector<8x8xbf16>, vector<8x8xf32> -> vector<8x8xf32>
    %c0_17 = arith.constant 0 : index
    %c0_18 = arith.constant 0 : index
    %c1_19 = arith.constant 1 : index
    %c0_20 = arith.constant 0 : index
    %c0_21 = arith.constant 0 : index
    %28 = vector.load %arg2[%c0_17, %c0_18, %c1_19, %c0_20, %c0_21] : memref<3x1x4x8x8xbf16, #tpu.memory_space<vmem>>, vector<1x1x1x8x8xbf16>
    %29 = vector.shape_cast %28 : vector<1x1x1x8x8xbf16> to vector<8x8xbf16>
    %30 = arith.extf %29 : vector<8x8xbf16> to vector<8x8xf32>
    %cst_22 = arith.constant 0.353553385 : f32
    %31 = vector.broadcast %cst_22 : f32 to vector<8x8xf32>
    %32 = arith.mulf %30, %31 : vector<8x8xf32>
    %33 = arith.truncf %32 : vector<8x8xf32> to vector<8x8xbf16>
    %c1_23 = arith.constant 1 : index
    %c0_24 = arith.constant 0 : index
    %c1_25 = arith.constant 1 : index
    %c0_26 = arith.constant 0 : index
    %c0_27 = arith.constant 0 : index
    %34 = vector.load %arg2[%c1_23, %c0_24, %c1_25, %c0_26, %c0_27] : memref<3x1x4x8x8xbf16, #tpu.memory_space<vmem>>, vector<1x1x1x8x8xbf16>
    %35 = vector.shape_cast %34 : vector<1x1x1x8x8xbf16> to vector<8x8xbf16>
    %c2_28 = arith.constant 2 : index
    %c0_29 = arith.constant 0 : index
    %c1_30 = arith.constant 1 : index
    %c0_31 = arith.constant 0 : index
    %c0_32 = arith.constant 0 : index
    %36 = vector.load %arg2[%c2_28, %c0_29, %c1_30, %c0_31, %c0_32] : memref<3x1x4x8x8xbf16, #tpu.memory_space<vmem>>, vector<1x1x1x8x8xbf16>
    %37 = vector.shape_cast %36 : vector<1x1x1x8x8xbf16> to vector<8x8xbf16>
    %cst_33 = arith.constant dense<0.000000e+00> : vector<8x8xf32>
    %38 = tpu.matmul %33, %35, %cst_33 {dimension_numbers = #tpu.dot_dimension_numbers<[1], [1], [0], [0], [0, 0, 1, 0], [], []>} : vector<8x8xbf16>, vector<8x8xbf16>, vector<8x8xf32> -> vector<8x8xf32>
    %cst_34 = arith.constant -1.000000e+30 : f32
    %39 = vector.broadcast %cst_34 : f32 to vector<8x8xf32>
    %40 = arith.select %2, %38, %39 : vector<8x8xi1>, vector<8x8xf32>
    %cst_35 = arith.constant dense<0xFF800000> : vector<8xf32>
    %41 = vector.multi_reduction <maximumf>, %40, %cst_35 [1] : vector<8x8xf32> to vector<8xf32>
    %42 = vector.shape_cast %41 : vector<8xf32> to vector<8x1xf32>
    %43 = vector.broadcast %42 : vector<8x1xf32> to vector<8x8xf32>
    %44 = arith.subf %40, %43 : vector<8x8xf32>
    %45 = math.exp %44 : vector<8x8xf32>
    %cst_36 = arith.constant dense<0.000000e+00> : vector<8xf32>
    %46 = vector.multi_reduction <add>, %45, %cst_36 [1] : vector<8x8xf32> to vector<8xf32>
    %47 = vector.shape_cast %46 : vector<8xf32> to vector<8x1xf32>
    %48 = tpu.reciprocal %47 {approx = true} : vector<8x1xf32> -> vector<8x1xf32>
    %49 = vector.broadcast %48 : vector<8x1xf32> to vector<8x8xf32>
    %50 = arith.mulf %45, %49 : vector<8x8xf32>
    %51 = arith.truncf %50 : vector<8x8xf32> to vector<8x8xbf16>
    %cst_37 = arith.constant dense<0.000000e+00> : vector<8x8xf32>
    %52 = tpu.matmul %51, %37, %cst_37 {dimension_numbers = #tpu.dot_dimension_numbers<[1], [0], [0], [1], [0, 0, 1, 1], [], []>} : vector<8x8xbf16>, vector<8x8xbf16>, vector<8x8xf32> -> vector<8x8xf32>
    %c0_38 = arith.constant 0 : index
    %c0_39 = arith.constant 0 : index
    %c2_40 = arith.constant 2 : index
    %c0_41 = arith.constant 0 : index
    %c0_42 = arith.constant 0 : index
    %53 = vector.load %arg2[%c0_38, %c0_39, %c2_40, %c0_41, %c0_42] : memref<3x1x4x8x8xbf16, #tpu.memory_space<vmem>>, vector<1x1x1x8x8xbf16>
    %54 = vector.shape_cast %53 : vector<1x1x1x8x8xbf16> to vector<8x8xbf16>
    %55 = arith.extf %54 : vector<8x8xbf16> to vector<8x8xf32>
    %cst_43 = arith.constant 0.353553385 : f32
    %56 = vector.broadcast %cst_43 : f32 to vector<8x8xf32>
    %57 = arith.mulf %55, %56 : vector<8x8xf32>
    %58 = arith.truncf %57 : vector<8x8xf32> to vector<8x8xbf16>
    %c1_44 = arith.constant 1 : index
    %c0_45 = arith.constant 0 : index
    %c2_46 = arith.constant 2 : index
    %c0_47 = arith.constant 0 : index
    %c0_48 = arith.constant 0 : index
    %59 = vector.load %arg2[%c1_44, %c0_45, %c2_46, %c0_47, %c0_48] : memref<3x1x4x8x8xbf16, #tpu.memory_space<vmem>>, vector<1x1x1x8x8xbf16>
    %60 = vector.shape_cast %59 : vector<1x1x1x8x8xbf16> to vector<8x8xbf16>
    %c2_49 = arith.constant 2 : index
    %c0_50 = arith.constant 0 : index
    %c2_51 = arith.constant 2 : index
    %c0_52 = arith.constant 0 : index
    %c0_53 = arith.constant 0 : index
    %61 = vector.load %arg2[%c2_49, %c0_50, %c2_51, %c0_52, %c0_53] : memref<3x1x4x8x8xbf16, #tpu.memory_space<vmem>>, vector<1x1x1x8x8xbf16>
    %62 = vector.shape_cast %61 : vector<1x1x1x8x8xbf16> to vector<8x8xbf16>
    %cst_54 = arith.constant dense<0.000000e+00> : vector<8x8xf32>
    %63 = tpu.matmul %58, %60, %cst_54 {dimension_numbers = #tpu.dot_dimension_numbers<[1], [1], [0], [0], [0, 0, 1, 0], [], []>} : vector<8x8xbf16>, vector<8x8xbf16>, vector<8x8xf32> -> vector<8x8xf32>
    %cst_55 = arith.constant -1.000000e+30 : f32
    %64 = vector.broadcast %cst_55 : f32 to vector<8x8xf32>
    %65 = arith.select %2, %63, %64 : vector<8x8xi1>, vector<8x8xf32>
    %cst_56 = arith.constant dense<0xFF800000> : vector<8xf32>
    %66 = vector.multi_reduction <maximumf>, %65, %cst_56 [1] : vector<8x8xf32> to vector<8xf32>
    %67 = vector.shape_cast %66 : vector<8xf32> to vector<8x1xf32>
    %68 = vector.broadcast %67 : vector<8x1xf32> to vector<8x8xf32>
    %69 = arith.subf %65, %68 : vector<8x8xf32>
    %70 = math.exp %69 : vector<8x8xf32>
    %cst_57 = arith.constant dense<0.000000e+00> : vector<8xf32>
    %71 = vector.multi_reduction <add>, %70, %cst_57 [1] : vector<8x8xf32> to vector<8xf32>
    %72 = vector.shape_cast %71 : vector<8xf32> to vector<8x1xf32>
    %73 = tpu.reciprocal %72 {approx = true} : vector<8x1xf32> -> vector<8x1xf32>
    %74 = vector.broadcast %73 : vector<8x1xf32> to vector<8x8xf32>
    %75 = arith.mulf %70, %74 : vector<8x8xf32>
    %76 = arith.truncf %75 : vector<8x8xf32> to vector<8x8xbf16>
    %cst_58 = arith.constant dense<0.000000e+00> : vector<8x8xf32>
    %77 = tpu.matmul %76, %62, %cst_58 {dimension_numbers = #tpu.dot_dimension_numbers<[1], [0], [0], [1], [0, 0, 1, 1], [], []>} : vector<8x8xbf16>, vector<8x8xbf16>, vector<8x8xf32> -> vector<8x8xf32>
    %c0_59 = arith.constant 0 : index
    %c0_60 = arith.constant 0 : index
    %c3 = arith.constant 3 : index
    %c0_61 = arith.constant 0 : index
    %c0_62 = arith.constant 0 : index
    %78 = vector.load %arg2[%c0_59, %c0_60, %c3, %c0_61, %c0_62] : memref<3x1x4x8x8xbf16, #tpu.memory_space<vmem>>, vector<1x1x1x8x8xbf16>
    %79 = vector.shape_cast %78 : vector<1x1x1x8x8xbf16> to vector<8x8xbf16>
    %80 = arith.extf %79 : vector<8x8xbf16> to vector<8x8xf32>
    %cst_63 = arith.constant 0.353553385 : f32
    %81 = vector.broadcast %cst_63 : f32 to vector<8x8xf32>
    %82 = arith.mulf %80, %81 : vector<8x8xf32>
    %83 = arith.truncf %82 : vector<8x8xf32> to vector<8x8xbf16>
    %c1_64 = arith.constant 1 : index
    %c0_65 = arith.constant 0 : index
    %c3_66 = arith.constant 3 : index
    %c0_67 = arith.constant 0 : index
    %c0_68 = arith.constant 0 : index
    %84 = vector.load %arg2[%c1_64, %c0_65, %c3_66, %c0_67, %c0_68] : memref<3x1x4x8x8xbf16, #tpu.memory_space<vmem>>, vector<1x1x1x8x8xbf16>
    %85 = vector.shape_cast %84 : vector<1x1x1x8x8xbf16> to vector<8x8xbf16>
    %c2_69 = arith.constant 2 : index
    %c0_70 = arith.constant 0 : index
    %c3_71 = arith.constant 3 : index
    %c0_72 = arith.constant 0 : index
    %c0_73 = arith.constant 0 : index
    %86 = vector.load %arg2[%c2_69, %c0_70, %c3_71, %c0_72, %c0_73] : memref<3x1x4x8x8xbf16, #tpu.memory_space<vmem>>, vector<1x1x1x8x8xbf16>
    %87 = vector.shape_cast %86 : vector<1x1x1x8x8xbf16> to vector<8x8xbf16>
    %cst_74 = arith.constant dense<0.000000e+00> : vector<8x8xf32>
    %88 = tpu.matmul %83, %85, %cst_74 {dimension_numbers = #tpu.dot_dimension_numbers<[1], [1], [0], [0], [0, 0, 1, 0], [], []>} : vector<8x8xbf16>, vector<8x8xbf16>, vector<8x8xf32> -> vector<8x8xf32>
    %cst_75 = arith.constant -1.000000e+30 : f32
    %89 = vector.broadcast %cst_75 : f32 to vector<8x8xf32>
    %90 = arith.select %2, %88, %89 : vector<8x8xi1>, vector<8x8xf32>
    %cst_76 = arith.constant dense<0xFF800000> : vector<8xf32>
    %91 = vector.multi_reduction <maximumf>, %90, %cst_76 [1] : vector<8x8xf32> to vector<8xf32>
    %92 = vector.shape_cast %91 : vector<8xf32> to vector<8x1xf32>
    %93 = vector.broadcast %92 : vector<8x1xf32> to vector<8x8xf32>
    %94 = arith.subf %90, %93 : vector<8x8xf32>
    %95 = math.exp %94 : vector<8x8xf32>
    %cst_77 = arith.constant dense<0.000000e+00> : vector<8xf32>
    %96 = vector.multi_reduction <add>, %95, %cst_77 [1] : vector<8x8xf32> to vector<8xf32>
    %97 = vector.shape_cast %96 : vector<8xf32> to vector<8x1xf32>
    %98 = tpu.reciprocal %97 {approx = true} : vector<8x1xf32> -> vector<8x1xf32>
    %99 = vector.broadcast %98 : vector<8x1xf32> to vector<8x8xf32>
    %100 = arith.mulf %95, %99 : vector<8x8xf32>
    %101 = arith.truncf %100 : vector<8x8xf32> to vector<8x8xbf16>
    %cst_78 = arith.constant dense<0.000000e+00> : vector<8x8xf32>
    %102 = tpu.matmul %101, %87, %cst_78 {dimension_numbers = #tpu.dot_dimension_numbers<[1], [0], [0], [1], [0, 0, 1, 1], [], []>} : vector<8x8xbf16>, vector<8x8xbf16>, vector<8x8xf32> -> vector<8x8xf32>
    %103 = tpu.concatenate %27, %52, %77, %102 in 1 : vector<8x8xf32>, vector<8x8xf32>, vector<8x8xf32>, vector<8x8xf32> -> vector<8x32xf32>
    %104 = arith.truncf %103 : vector<8x32xf32> to vector<8x32xbf16>
    %c0_79 = arith.constant 0 : index
    %c0_80 = arith.constant 0 : index
    %c0_81 = arith.constant 0 : index
    %105 = vector.load %arg3[%c0_79, %c0_80, %c0_81] : memref<1x8x32xbf16, #tpu.memory_space<vmem>>, vector<1x8x32xbf16>
    %106 = vector.shape_cast %105 : vector<1x8x32xbf16> to vector<8x32xbf16>
    %107 = vector.shape_cast %104 : vector<8x32xbf16> to vector<1x8x32xbf16>
    tpu.vector_store %arg3[%c0_79, %c0_80, %c0_81], %107 {strides = array<i32>} : memref<1x8x32xbf16, #tpu.memory_space<vmem>>, vector<1x8x32xbf16>,
    return
  }
  func.func @transform_0(%arg0: i32, %arg1: i32) -> (i32, i32, i32, i32, i32) {
    %c0_i32 = arith.constant 0 : i32
    %c0_i32_0 = arith.constant 0 : i32
    %c0_i32_1 = arith.constant 0 : i32
    %c0_i32_2 = arith.constant 0 : i32
    return %c0_i32, %arg0, %arg1, %c0_i32_0, %c0_i32_1 : i32, i32, i32, i32, i32
  }
  func.func @transform_1(%arg0: i32, %arg1: i32) -> (i32, i32, i32) {
    %c0_i32 = arith.constant 0 : i32
    %c0_i32_0 = arith.constant 0 : i32
    return %arg0, %c0_i32, %arg1 : i32, i32, i32
  }
}

module attributes {stable_mosaic.version = 11 : i64} {
  func.func @_ln_matmul_kernel(%arg0: i32, %arg1: i32, %arg2: memref<16x32xf32, #tpu.memory_space<vmem>>, %arg3: memref<1x32xf32, #tpu.memory_space<vmem>>, %arg4: memref<1x32xf32, #tpu.memory_space<vmem>>, %arg5: memref<32x96xbf16, #tpu.memory_space<vmem>>, %arg6: memref<1x96xf32, #tpu.memory_space<vmem>>, %arg7: memref<16x96xbf16, #tpu.memory_space<vmem>>) attributes {dimension_semantics = [#tpu.dimension_semantics<parallel>, #tpu.dimension_semantics<parallel>], iteration_bounds = array<i64: 1, 1>, scalar_prefetch = 0 : i64, scratch_operands = 0 : i64, tpu.core_type = #tpu.core_type<tc>, window_params = [{transform_indices = @transform_0, window_bounds = array<i64: 16, 32>}, {pipeline_mode = #tpu.pipeline_mode<synchronous>, transform_indices = @transform_1, window_bounds = array<i64: 1, 32>}, {pipeline_mode = #tpu.pipeline_mode<synchronous>, transform_indices = @transform_2, window_bounds = array<i64: 1, 32>}, {transform_indices = @transform_3, window_bounds = array<i64: 32, 96>}, {transform_indices = @transform_4, window_bounds = array<i64: 1, 96>}, {transform_indices = @transform_5, window_bounds = array<i64: 16, 96>}]} {
    %c0 = arith.constant 0 : index
    %c0_0 = arith.constant 0 : index
    %0 = vector.load %arg2[%c0, %c0_0] : memref<16x32xf32, #tpu.memory_space<vmem>>, vector<16x32xf32>
    %cst = arith.constant dense<0.000000e+00> : vector<16xf32>
    %1 = vector.multi_reduction <add>, %0, %cst [1] : vector<16x32xf32> to vector<16xf32>
    %2 = vector.shape_cast %1 : vector<16xf32> to vector<16x1xf32>
    %cst_1 = arith.constant 3.200000e+01 : f32
    %3 = vector.broadcast %cst_1 : f32 to vector<16x1xf32>
    %4 = arith.divf %2, %3 : vector<16x1xf32>
    %5 = vector.broadcast %4 : vector<16x1xf32> to vector<16x32xf32>
    %6 = arith.subf %0, %5 : vector<16x32xf32>
    %7 = arith.mulf %6, %6 : vector<16x32xf32>
    %cst_2 = arith.constant dense<0.000000e+00> : vector<16xf32>
    %8 = vector.multi_reduction <add>, %7, %cst_2 [1] : vector<16x32xf32> to vector<16xf32>
    %9 = vector.shape_cast %8 : vector<16xf32> to vector<16x1xf32>
    %cst_3 = arith.constant 3.200000e+01 : f32
    %10 = vector.broadcast %cst_3 : f32 to vector<16x1xf32>
    %11 = arith.divf %9, %10 : vector<16x1xf32>
    %12 = vector.broadcast %4 : vector<16x1xf32> to vector<16x32xf32>
    %13 = arith.subf %0, %12 : vector<16x32xf32>
    %cst_4 = arith.constant 9.99999974E-6 : f32
    %14 = vector.broadcast %cst_4 : f32 to vector<16x1xf32>
    %15 = arith.addf %11, %14 : vector<16x1xf32>
    %16 = math.rsqrt %15 : vector<16x1xf32>
    %17 = vector.broadcast %16 : vector<16x1xf32> to vector<16x32xf32>
    %18 = arith.mulf %13, %17 : vector<16x32xf32>
    %c0_5 = arith.constant 0 : index
    %c0_6 = arith.constant 0 : index
    %19 = vector.load %arg3[%c0_5, %c0_6] : memref<1x32xf32, #tpu.memory_space<vmem>>, vector<1x32xf32>
    %20 = vector.broadcast %19 : vector<1x32xf32> to vector<16x32xf32>
    %21 = arith.mulf %18, %20 : vector<16x32xf32>
    %c0_7 = arith.constant 0 : index
    %c0_8 = arith.constant 0 : index
    %22 = vector.load %arg4[%c0_7, %c0_8] : memref<1x32xf32, #tpu.memory_space<vmem>>, vector<1x32xf32>
    %23 = vector.broadcast %22 : vector<1x32xf32> to vector<16x32xf32>
    %24 = arith.addf %21, %23 : vector<16x32xf32>
    %25 = arith.truncf %24 : vector<16x32xf32> to vector<16x32xbf16>
    %c0_9 = arith.constant 0 : index
    %c0_10 = arith.constant 0 : index
    %26 = vector.load %arg5[%c0_9, %c0_10] : memref<32x96xbf16, #tpu.memory_space<vmem>>, vector<32x96xbf16>
    %cst_11 = arith.constant dense<0.000000e+00> : vector<16x96xf32>
    %27 = tpu.matmul %25, %26, %cst_11 {dimension_numbers = #tpu.dot_dimension_numbers<[1], [0], [0], [1], [0, 0, 1, 1], [], []>} : vector<16x32xbf16>, vector<32x96xbf16>, vector<16x96xf32> -> vector<16x96xf32>
    %c0_12 = arith.constant 0 : index
    %c0_13 = arith.constant 0 : index
    %28 = vector.load %arg6[%c0_12, %c0_13] : memref<1x96xf32, #tpu.memory_space<vmem>>, vector<1x96xf32>
    %29 = vector.broadcast %28 : vector<1x96xf32> to vector<16x96xf32>
    %30 = arith.addf %27, %29 : vector<16x96xf32>
    %31 = arith.truncf %30 : vector<16x96xf32> to vector<16x96xbf16>
    %c0_14 = arith.constant 0 : index
    %c0_15 = arith.constant 0 : index
    %32 = vector.load %arg7[%c0_14, %c0_15] : memref<16x96xbf16, #tpu.memory_space<vmem>>, vector<16x96xbf16>
    tpu.vector_store %arg7[%c0_14, %c0_15], %31 {strides = array<i32>} : memref<16x96xbf16, #tpu.memory_space<vmem>>, vector<16x96xbf16>,
    return
  }
  func.func @transform_0(%arg0: i32, %arg1: i32) -> (i32, i32) {
    %c0_i32 = arith.constant 0 : i32
    %c0_i32_0 = arith.constant 0 : i32
    return %arg0, %c0_i32 : i32, i32
  }
  func.func @transform_1(%arg0: i32, %arg1: i32) -> (i32, i32) {
    %c0_i32 = arith.constant 0 : i32
    %c0_i32_0 = arith.constant 0 : i32
    %c0_i32_1 = arith.constant 0 : i32
    return %c0_i32, %c0_i32_0 : i32, i32
  }
  func.func @transform_2(%arg0: i32, %arg1: i32) -> (i32, i32) {
    %c0_i32 = arith.constant 0 : i32
    %c0_i32_0 = arith.constant 0 : i32
    %c0_i32_1 = arith.constant 0 : i32
    return %c0_i32, %c0_i32_0 : i32, i32
  }
  func.func @transform_3(%arg0: i32, %arg1: i32) -> (i32, i32) {
    %c0_i32 = arith.constant 0 : i32
    %c0_i32_0 = arith.constant 0 : i32
    return %c0_i32, %arg1 : i32, i32
  }
  func.func @transform_4(%arg0: i32, %arg1: i32) -> (i32, i32) {
    %c0_i32 = arith.constant 0 : i32
    %c0_i32_0 = arith.constant 0 : i32
    return %c0_i32, %arg1 : i32, i32
  }
  func.func @transform_5(%arg0: i32, %arg1: i32) -> (i32, i32) {
    %c0_i32 = arith.constant 0 : i32
    return %arg0, %arg1 : i32, i32
  }
}

module attributes {stable_mosaic.version = 11 : i64} {
  func.func @_ln_matmul_kernel(%arg0: i32, %arg1: i32, %arg2: memref<16x32xf32, #tpu.memory_space<vmem>>, %arg3: memref<1x32xf32, #tpu.memory_space<vmem>>, %arg4: memref<1x32xf32, #tpu.memory_space<vmem>>, %arg5: memref<32x128xbf16, #tpu.memory_space<vmem>>, %arg6: memref<1x128xf32, #tpu.memory_space<vmem>>, %arg7: memref<16x128xbf16, #tpu.memory_space<vmem>>) attributes {dimension_semantics = [#tpu.dimension_semantics<parallel>, #tpu.dimension_semantics<parallel>], iteration_bounds = array<i64: 1, 1>, scalar_prefetch = 0 : i64, scratch_operands = 0 : i64, tpu.core_type = #tpu.core_type<tc>, window_params = [{transform_indices = @transform_0, window_bounds = array<i64: 16, 32>}, {pipeline_mode = #tpu.pipeline_mode<synchronous>, transform_indices = @transform_1, window_bounds = array<i64: 1, 32>}, {pipeline_mode = #tpu.pipeline_mode<synchronous>, transform_indices = @transform_2, window_bounds = array<i64: 1, 32>}, {transform_indices = @transform_3, window_bounds = array<i64: 32, 128>}, {transform_indices = @transform_4, window_bounds = array<i64: 1, 128>}, {transform_indices = @transform_5, window_bounds = array<i64: 16, 128>}]} {
    %c0 = arith.constant 0 : index
    %c0_0 = arith.constant 0 : index
    %0 = vector.load %arg2[%c0, %c0_0] : memref<16x32xf32, #tpu.memory_space<vmem>>, vector<16x32xf32>
    %cst = arith.constant dense<0.000000e+00> : vector<16xf32>
    %1 = vector.multi_reduction <add>, %0, %cst [1] : vector<16x32xf32> to vector<16xf32>
    %2 = vector.shape_cast %1 : vector<16xf32> to vector<16x1xf32>
    %cst_1 = arith.constant 3.200000e+01 : f32
    %3 = vector.broadcast %cst_1 : f32 to vector<16x1xf32>
    %4 = arith.divf %2, %3 : vector<16x1xf32>
    %5 = vector.broadcast %4 : vector<16x1xf32> to vector<16x32xf32>
    %6 = arith.subf %0, %5 : vector<16x32xf32>
    %7 = arith.mulf %6, %6 : vector<16x32xf32>
    %cst_2 = arith.constant dense<0.000000e+00> : vector<16xf32>
    %8 = vector.multi_reduction <add>, %7, %cst_2 [1] : vector<16x32xf32> to vector<16xf32>
    %9 = vector.shape_cast %8 : vector<16xf32> to vector<16x1xf32>
    %cst_3 = arith.constant 3.200000e+01 : f32
    %10 = vector.broadcast %cst_3 : f32 to vector<16x1xf32>
    %11 = arith.divf %9, %10 : vector<16x1xf32>
    %12 = vector.broadcast %4 : vector<16x1xf32> to vector<16x32xf32>
    %13 = arith.subf %0, %12 : vector<16x32xf32>
    %cst_4 = arith.constant 9.99999974E-6 : f32
    %14 = vector.broadcast %cst_4 : f32 to vector<16x1xf32>
    %15 = arith.addf %11, %14 : vector<16x1xf32>
    %16 = math.rsqrt %15 : vector<16x1xf32>
    %17 = vector.broadcast %16 : vector<16x1xf32> to vector<16x32xf32>
    %18 = arith.mulf %13, %17 : vector<16x32xf32>
    %c0_5 = arith.constant 0 : index
    %c0_6 = arith.constant 0 : index
    %19 = vector.load %arg3[%c0_5, %c0_6] : memref<1x32xf32, #tpu.memory_space<vmem>>, vector<1x32xf32>
    %20 = vector.broadcast %19 : vector<1x32xf32> to vector<16x32xf32>
    %21 = arith.mulf %18, %20 : vector<16x32xf32>
    %c0_7 = arith.constant 0 : index
    %c0_8 = arith.constant 0 : index
    %22 = vector.load %arg4[%c0_7, %c0_8] : memref<1x32xf32, #tpu.memory_space<vmem>>, vector<1x32xf32>
    %23 = vector.broadcast %22 : vector<1x32xf32> to vector<16x32xf32>
    %24 = arith.addf %21, %23 : vector<16x32xf32>
    %25 = arith.truncf %24 : vector<16x32xf32> to vector<16x32xbf16>
    %c0_9 = arith.constant 0 : index
    %c0_10 = arith.constant 0 : index
    %26 = vector.load %arg5[%c0_9, %c0_10] : memref<32x128xbf16, #tpu.memory_space<vmem>>, vector<32x128xbf16>
    %cst_11 = arith.constant dense<0.000000e+00> : vector<16x128xf32>
    %27 = tpu.matmul %25, %26, %cst_11 {dimension_numbers = #tpu.dot_dimension_numbers<[1], [0], [0], [1], [0, 0, 1, 1], [], []>} : vector<16x32xbf16>, vector<32x128xbf16>, vector<16x128xf32> -> vector<16x128xf32>
    %c0_12 = arith.constant 0 : index
    %c0_13 = arith.constant 0 : index
    %28 = vector.load %arg6[%c0_12, %c0_13] : memref<1x128xf32, #tpu.memory_space<vmem>>, vector<1x128xf32>
    %29 = vector.broadcast %28 : vector<1x128xf32> to vector<16x128xf32>
    %30 = arith.addf %27, %29 : vector<16x128xf32>
    %cst_14 = arith.constant 5.000000e-01 : f32
    %31 = vector.broadcast %cst_14 : f32 to vector<16x128xf32>
    %32 = arith.mulf %31, %30 : vector<16x128xf32>
    %cst_15 = arith.constant 0.707106769 : f32
    %33 = vector.broadcast %cst_15 : f32 to vector<16x128xf32>
    %34 = arith.mulf %30, %33 : vector<16x128xf32>
    %35 = math.erf %34 : vector<16x128xf32>
    %cst_16 = arith.constant 1.000000e+00 : f32
    %36 = vector.broadcast %cst_16 : f32 to vector<16x128xf32>
    %37 = arith.addf %36, %35 : vector<16x128xf32>
    %38 = arith.mulf %32, %37 : vector<16x128xf32>
    %39 = arith.truncf %38 : vector<16x128xf32> to vector<16x128xbf16>
    %c0_17 = arith.constant 0 : index
    %c0_18 = arith.constant 0 : index
    %40 = vector.load %arg7[%c0_17, %c0_18] : memref<16x128xbf16, #tpu.memory_space<vmem>>, vector<16x128xbf16>
    tpu.vector_store %arg7[%c0_17, %c0_18], %39 {strides = array<i32>} : memref<16x128xbf16, #tpu.memory_space<vmem>>, vector<16x128xbf16>,
    return
  }
  func.func @transform_0(%arg0: i32, %arg1: i32) -> (i32, i32) {
    %c0_i32 = arith.constant 0 : i32
    %c0_i32_0 = arith.constant 0 : i32
    return %arg0, %c0_i32 : i32, i32
  }
  func.func @transform_1(%arg0: i32, %arg1: i32) -> (i32, i32) {
    %c0_i32 = arith.constant 0 : i32
    %c0_i32_0 = arith.constant 0 : i32
    %c0_i32_1 = arith.constant 0 : i32
    return %c0_i32, %c0_i32_0 : i32, i32
  }
  func.func @transform_2(%arg0: i32, %arg1: i32) -> (i32, i32) {
    %c0_i32 = arith.constant 0 : i32
    %c0_i32_0 = arith.constant 0 : i32
    %c0_i32_1 = arith.constant 0 : i32
    return %c0_i32, %c0_i32_0 : i32, i32
  }
  func.func @transform_3(%arg0: i32, %arg1: i32) -> (i32, i32) {
    %c0_i32 = arith.constant 0 : i32
    %c0_i32_0 = arith.constant 0 : i32
    return %c0_i32, %arg1 : i32, i32
  }
  func.func @transform_4(%arg0: i32, %arg1: i32) -> (i32, i32) {
    %c0_i32 = arith.constant 0 : i32
    %c0_i32_0 = arith.constant 0 : i32
    return %c0_i32, %arg1 : i32, i32
  }
  func.func @transform_5(%arg0: i32, %arg1: i32) -> (i32, i32) {
    %c0_i32 = arith.constant 0 : i32
    return %arg0, %arg1 : i32, i32
  }
}

module attributes {stable_mosaic.version = 11 : i64} {
  func.func @_matmul_res_kernel(%arg0: i32, %arg1: i32, %arg2: i32, %arg3: memref<16x32xbf16, #tpu.memory_space<vmem>>, %arg4: memref<32x32xbf16, #tpu.memory_space<vmem>>, %arg5: memref<1x32xf32, #tpu.memory_space<vmem>>, %arg6: memref<16x32xf32, #tpu.memory_space<vmem>>, %arg7: memref<16x32xf32, #tpu.memory_space<vmem>>, %arg8: memref<16x32xf32, #tpu.memory_space<vmem>>) attributes {dimension_semantics = [#tpu.dimension_semantics<parallel>, #tpu.dimension_semantics<parallel>, #tpu.dimension_semantics<arbitrary>], iteration_bounds = array<i64: 1, 1, 1>, scalar_prefetch = 0 : i64, scratch_operands = 1 : i64, tpu.core_type = #tpu.core_type<tc>, window_params = [{transform_indices = @transform_0, window_bounds = array<i64: 16, 32>}, {transform_indices = @transform_1, window_bounds = array<i64: 32, 32>}, {transform_indices = @transform_2, window_bounds = array<i64: 1, 32>}, {transform_indices = @transform_3, window_bounds = array<i64: 16, 32>}, {transform_indices = @transform_4, window_bounds = array<i64: 16, 32>}]} {
    %c0_i32 = arith.constant 0 : i32
    %0 = arith.cmpi eq, %arg2, %c0_i32 : i32
    %1 = arith.extui %0 : i1 to i32
    %c0_i32_0 = arith.constant 0 : i32
    %2 = arith.cmpi ne, %1, %c0_i32_0 : i32
    scf.if %2 {
      %cst_10 = arith.constant 0.000000e+00 : f32
      %12 = vector.broadcast %cst_10 : f32 to vector<16x32xf32>
      %c0_11 = arith.constant 0 : index
      %c0_12 = arith.constant 0 : index
      %13 = vector.load %arg8[%c0_11, %c0_12] : memref<16x32xf32, #tpu.memory_space<vmem>>, vector<16x32xf32>
      tpu.vector_store %arg8[%c0_11, %c0_12], %12 {strides = array<i32>} : memref<16x32xf32, #tpu.memory_space<vmem>>, vector<16x32xf32>,
    } else {
    }
    %c0 = arith.constant 0 : index
    %c0_1 = arith.constant 0 : index
    %3 = vector.load %arg8[%c0, %c0_1] : memref<16x32xf32, #tpu.memory_space<vmem>>, vector<16x32xf32>
    %c0_2 = arith.constant 0 : index
    %c0_3 = arith.constant 0 : index
    %4 = vector.load %arg3[%c0_2, %c0_3] : memref<16x32xbf16, #tpu.memory_space<vmem>>, vector<16x32xbf16>
    %c0_4 = arith.constant 0 : index
    %c0_5 = arith.constant 0 : index
    %5 = vector.load %arg4[%c0_4, %c0_5] : memref<32x32xbf16, #tpu.memory_space<vmem>>, vector<32x32xbf16>
    %cst = arith.constant dense<0.000000e+00> : vector<16x32xf32>
    %6 = tpu.matmul %4, %5, %cst {dimension_numbers = #tpu.dot_dimension_numbers<[1], [0], [0], [1], [0, 0, 1, 1], [], []>} : vector<16x32xbf16>, vector<32x32xbf16>, vector<16x32xf32> -> vector<16x32xf32>
    %7 = arith.addf %3, %6 : vector<16x32xf32>
    %c0_6 = arith.constant 0 : index
    %c0_7 = arith.constant 0 : index
    %8 = vector.load %arg8[%c0_6, %c0_7] : memref<16x32xf32, #tpu.memory_space<vmem>>, vector<16x32xf32>
    tpu.vector_store %arg8[%c0_6, %c0_7], %7 {strides = array<i32>} : memref<16x32xf32, #tpu.memory_space<vmem>>, vector<16x32xf32>,
    %c0_i32_8 = arith.constant 0 : i32
    %9 = arith.cmpi eq, %arg2, %c0_i32_8 : i32
    %10 = arith.extui %9 : i1 to i32
    %c0_i32_9 = arith.constant 0 : i32
    %11 = arith.cmpi ne, %10, %c0_i32_9 : i32
    scf.if %11 {
      %c0_10 = arith.constant 0 : index
      %c0_11 = arith.constant 0 : index
      %12 = vector.load %arg8[%c0_10, %c0_11] : memref<16x32xf32, #tpu.memory_space<vmem>>, vector<16x32xf32>
      %c0_12 = arith.constant 0 : index
      %c0_13 = arith.constant 0 : index
      %13 = vector.load %arg5[%c0_12, %c0_13] : memref<1x32xf32, #tpu.memory_space<vmem>>, vector<1x32xf32>
      %14 = vector.broadcast %13 : vector<1x32xf32> to vector<16x32xf32>
      %15 = arith.addf %12, %14 : vector<16x32xf32>
      %c0_14 = arith.constant 0 : index
      %c0_15 = arith.constant 0 : index
      %16 = vector.load %arg6[%c0_14, %c0_15] : memref<16x32xf32, #tpu.memory_space<vmem>>, vector<16x32xf32>
      %17 = arith.addf %15, %16 : vector<16x32xf32>
      %c0_16 = arith.constant 0 : index
      %c0_17 = arith.constant 0 : index
      %18 = vector.load %arg7[%c0_16, %c0_17] : memref<16x32xf32, #tpu.memory_space<vmem>>, vector<16x32xf32>
      tpu.vector_store %arg7[%c0_16, %c0_17], %17 {strides = array<i32>} : memref<16x32xf32, #tpu.memory_space<vmem>>, vector<16x32xf32>,
    } else {
    }
    return
  }
  func.func @transform_0(%arg0: i32, %arg1: i32, %arg2: i32) -> (i32, i32) {
    %c0_i32 = arith.constant 0 : i32
    return %arg0, %arg2 : i32, i32
  }
  func.func @transform_1(%arg0: i32, %arg1: i32, %arg2: i32) -> (i32, i32) {
    %c0_i32 = arith.constant 0 : i32
    return %arg2, %arg1 : i32, i32
  }
  func.func @transform_2(%arg0: i32, %arg1: i32, %arg2: i32) -> (i32, i32) {
    %c0_i32 = arith.constant 0 : i32
    %c0_i32_0 = arith.constant 0 : i32
    return %c0_i32, %arg1 : i32, i32
  }
  func.func @transform_3(%arg0: i32, %arg1: i32, %arg2: i32) -> (i32, i32) {
    %c0_i32 = arith.constant 0 : i32
    return %arg0, %arg1 : i32, i32
  }
  func.func @transform_4(%arg0: i32, %arg1: i32, %arg2: i32) -> (i32, i32) {
    %c0_i32 = arith.constant 0 : i32
    return %arg0, %arg1 : i32, i32
  }
}

module attributes {stable_mosaic.version = 11 : i64} {
  func.func @_matmul_res_kernel(%arg0: i32, %arg1: i32, %arg2: i32, %arg3: memref<16x128xbf16, #tpu.memory_space<vmem>>, %arg4: memref<128x32xbf16, #tpu.memory_space<vmem>>, %arg5: memref<1x32xf32, #tpu.memory_space<vmem>>, %arg6: memref<16x32xf32, #tpu.memory_space<vmem>>, %arg7: memref<16x32xf32, #tpu.memory_space<vmem>>, %arg8: memref<16x32xf32, #tpu.memory_space<vmem>>) attributes {dimension_semantics = [#tpu.dimension_semantics<parallel>, #tpu.dimension_semantics<parallel>, #tpu.dimension_semantics<arbitrary>], iteration_bounds = array<i64: 1, 1, 1>, scalar_prefetch = 0 : i64, scratch_operands = 1 : i64, tpu.core_type = #tpu.core_type<tc>, window_params = [{transform_indices = @transform_0, window_bounds = array<i64: 16, 128>}, {transform_indices = @transform_1, window_bounds = array<i64: 128, 32>}, {transform_indices = @transform_2, window_bounds = array<i64: 1, 32>}, {transform_indices = @transform_3, window_bounds = array<i64: 16, 32>}, {transform_indices = @transform_4, window_bounds = array<i64: 16, 32>}]} {
    %c0_i32 = arith.constant 0 : i32
    %0 = arith.cmpi eq, %arg2, %c0_i32 : i32
    %1 = arith.extui %0 : i1 to i32
    %c0_i32_0 = arith.constant 0 : i32
    %2 = arith.cmpi ne, %1, %c0_i32_0 : i32
    scf.if %2 {
      %cst_10 = arith.constant 0.000000e+00 : f32
      %12 = vector.broadcast %cst_10 : f32 to vector<16x32xf32>
      %c0_11 = arith.constant 0 : index
      %c0_12 = arith.constant 0 : index
      %13 = vector.load %arg8[%c0_11, %c0_12] : memref<16x32xf32, #tpu.memory_space<vmem>>, vector<16x32xf32>
      tpu.vector_store %arg8[%c0_11, %c0_12], %12 {strides = array<i32>} : memref<16x32xf32, #tpu.memory_space<vmem>>, vector<16x32xf32>,
    } else {
    }
    %c0 = arith.constant 0 : index
    %c0_1 = arith.constant 0 : index
    %3 = vector.load %arg8[%c0, %c0_1] : memref<16x32xf32, #tpu.memory_space<vmem>>, vector<16x32xf32>
    %c0_2 = arith.constant 0 : index
    %c0_3 = arith.constant 0 : index
    %4 = vector.load %arg3[%c0_2, %c0_3] : memref<16x128xbf16, #tpu.memory_space<vmem>>, vector<16x128xbf16>
    %c0_4 = arith.constant 0 : index
    %c0_5 = arith.constant 0 : index
    %5 = vector.load %arg4[%c0_4, %c0_5] : memref<128x32xbf16, #tpu.memory_space<vmem>>, vector<128x32xbf16>
    %cst = arith.constant dense<0.000000e+00> : vector<16x32xf32>
    %6 = tpu.matmul %4, %5, %cst {dimension_numbers = #tpu.dot_dimension_numbers<[1], [0], [0], [1], [0, 0, 1, 1], [], []>} : vector<16x128xbf16>, vector<128x32xbf16>, vector<16x32xf32> -> vector<16x32xf32>
    %7 = arith.addf %3, %6 : vector<16x32xf32>
    %c0_6 = arith.constant 0 : index
    %c0_7 = arith.constant 0 : index
    %8 = vector.load %arg8[%c0_6, %c0_7] : memref<16x32xf32, #tpu.memory_space<vmem>>, vector<16x32xf32>
    tpu.vector_store %arg8[%c0_6, %c0_7], %7 {strides = array<i32>} : memref<16x32xf32, #tpu.memory_space<vmem>>, vector<16x32xf32>,
    %c0_i32_8 = arith.constant 0 : i32
    %9 = arith.cmpi eq, %arg2, %c0_i32_8 : i32
    %10 = arith.extui %9 : i1 to i32
    %c0_i32_9 = arith.constant 0 : i32
    %11 = arith.cmpi ne, %10, %c0_i32_9 : i32
    scf.if %11 {
      %c0_10 = arith.constant 0 : index
      %c0_11 = arith.constant 0 : index
      %12 = vector.load %arg8[%c0_10, %c0_11] : memref<16x32xf32, #tpu.memory_space<vmem>>, vector<16x32xf32>
      %c0_12 = arith.constant 0 : index
      %c0_13 = arith.constant 0 : index
      %13 = vector.load %arg5[%c0_12, %c0_13] : memref<1x32xf32, #tpu.memory_space<vmem>>, vector<1x32xf32>
      %14 = vector.broadcast %13 : vector<1x32xf32> to vector<16x32xf32>
      %15 = arith.addf %12, %14 : vector<16x32xf32>
      %c0_14 = arith.constant 0 : index
      %c0_15 = arith.constant 0 : index
      %16 = vector.load %arg6[%c0_14, %c0_15] : memref<16x32xf32, #tpu.memory_space<vmem>>, vector<16x32xf32>
      %17 = arith.addf %15, %16 : vector<16x32xf32>
      %c0_16 = arith.constant 0 : index
      %c0_17 = arith.constant 0 : index
      %18 = vector.load %arg7[%c0_16, %c0_17] : memref<16x32xf32, #tpu.memory_space<vmem>>, vector<16x32xf32>
      tpu.vector_store %arg7[%c0_16, %c0_17], %17 {strides = array<i32>} : memref<16x32xf32, #tpu.memory_space<vmem>>, vector<16x32xf32>,
    } else {
    }
    return
  }
  func.func @transform_0(%arg0: i32, %arg1: i32, %arg2: i32) -> (i32, i32) {
    %c0_i32 = arith.constant 0 : i32
    return %arg0, %arg2 : i32, i32
  }
  func.func @transform_1(%arg0: i32, %arg1: i32, %arg2: i32) -> (i32, i32) {
    %c0_i32 = arith.constant 0 : i32
    return %arg2, %arg1 : i32, i32
  }
  func.func @transform_2(%arg0: i32, %arg1: i32, %arg2: i32) -> (i32, i32) {
    %c0_i32 = arith.constant 0 : i32
    %c0_i32_0 = arith.constant 0 : i32
    return %c0_i32, %arg1 : i32, i32
  }
  func.func @transform_3(%arg0: i32, %arg1: i32, %arg2: i32) -> (i32, i32) {
    %c0_i32 = arith.constant 0 : i32
    return %arg0, %arg1 : i32, i32
  }
  func.func @transform_4(%arg0: i32, %arg1: i32, %arg2: i32) -> (i32, i32) {
    %c0_i32 = arith.constant 0 : i32
    return %arg0, %arg1 : i32, i32
  }
}

module attributes {stable_mosaic.version = 11 : i64} {
  func.func @_layernorm_kernel(%arg0: i32, %arg1: memref<16x32xf32, #tpu.memory_space<vmem>>, %arg2: memref<1x32xf32, #tpu.memory_space<vmem>>, %arg3: memref<1x32xf32, #tpu.memory_space<vmem>>, %arg4: memref<16x32xf32, #tpu.memory_space<vmem>>) attributes {dimension_semantics = [#tpu.dimension_semantics<parallel>], iteration_bounds = array<i64: 1>, scalar_prefetch = 0 : i64, scratch_operands = 0 : i64, tpu.core_type = #tpu.core_type<tc>, window_params = [{transform_indices = @transform_0, window_bounds = array<i64: 16, 32>}, {pipeline_mode = #tpu.pipeline_mode<synchronous>, transform_indices = @transform_1, window_bounds = array<i64: 1, 32>}, {pipeline_mode = #tpu.pipeline_mode<synchronous>, transform_indices = @transform_2, window_bounds = array<i64: 1, 32>}, {transform_indices = @transform_3, window_bounds = array<i64: 16, 32>}]} {
    %c0 = arith.constant 0 : index
    %c0_0 = arith.constant 0 : index
    %0 = vector.load %arg1[%c0, %c0_0] : memref<16x32xf32, #tpu.memory_space<vmem>>, vector<16x32xf32>
    %cst = arith.constant dense<0.000000e+00> : vector<16xf32>
    %1 = vector.multi_reduction <add>, %0, %cst [1] : vector<16x32xf32> to vector<16xf32>
    %2 = vector.shape_cast %1 : vector<16xf32> to vector<16x1xf32>
    %cst_1 = arith.constant 3.200000e+01 : f32
    %3 = vector.broadcast %cst_1 : f32 to vector<16x1xf32>
    %4 = arith.divf %2, %3 : vector<16x1xf32>
    %5 = vector.broadcast %4 : vector<16x1xf32> to vector<16x32xf32>
    %6 = arith.subf %0, %5 : vector<16x32xf32>
    %7 = arith.mulf %6, %6 : vector<16x32xf32>
    %cst_2 = arith.constant dense<0.000000e+00> : vector<16xf32>
    %8 = vector.multi_reduction <add>, %7, %cst_2 [1] : vector<16x32xf32> to vector<16xf32>
    %9 = vector.shape_cast %8 : vector<16xf32> to vector<16x1xf32>
    %cst_3 = arith.constant 3.200000e+01 : f32
    %10 = vector.broadcast %cst_3 : f32 to vector<16x1xf32>
    %11 = arith.divf %9, %10 : vector<16x1xf32>
    %12 = vector.broadcast %4 : vector<16x1xf32> to vector<16x32xf32>
    %13 = arith.subf %0, %12 : vector<16x32xf32>
    %cst_4 = arith.constant 9.99999974E-6 : f32
    %14 = vector.broadcast %cst_4 : f32 to vector<16x1xf32>
    %15 = arith.addf %11, %14 : vector<16x1xf32>
    %16 = math.rsqrt %15 : vector<16x1xf32>
    %17 = vector.broadcast %16 : vector<16x1xf32> to vector<16x32xf32>
    %18 = arith.mulf %13, %17 : vector<16x32xf32>
    %c0_5 = arith.constant 0 : index
    %c0_6 = arith.constant 0 : index
    %19 = vector.load %arg2[%c0_5, %c0_6] : memref<1x32xf32, #tpu.memory_space<vmem>>, vector<1x32xf32>
    %20 = vector.broadcast %19 : vector<1x32xf32> to vector<16x32xf32>
    %21 = arith.mulf %18, %20 : vector<16x32xf32>
    %c0_7 = arith.constant 0 : index
    %c0_8 = arith.constant 0 : index
    %22 = vector.load %arg3[%c0_7, %c0_8] : memref<1x32xf32, #tpu.memory_space<vmem>>, vector<1x32xf32>
    %23 = vector.broadcast %22 : vector<1x32xf32> to vector<16x32xf32>
    %24 = arith.addf %21, %23 : vector<16x32xf32>
    %c0_9 = arith.constant 0 : index
    %c0_10 = arith.constant 0 : index
    %25 = vector.load %arg4[%c0_9, %c0_10] : memref<16x32xf32, #tpu.memory_space<vmem>>, vector<16x32xf32>
    tpu.vector_store %arg4[%c0_9, %c0_10], %24 {strides = array<i32>} : memref<16x32xf32, #tpu.memory_space<vmem>>, vector<16x32xf32>,
    return
  }
  func.func @transform_0(%arg0: i32) -> (i32, i32) {
    %c0_i32 = arith.constant 0 : i32
    %c0_i32_0 = arith.constant 0 : i32
    return %arg0, %c0_i32 : i32, i32
  }
  func.func @transform_1(%arg0: i32) -> (i32, i32) {
    %c0_i32 = arith.constant 0 : i32
    %c0_i32_0 = arith.constant 0 : i32
    %c0_i32_1 = arith.constant 0 : i32
    return %c0_i32, %c0_i32_0 : i32, i32
  }
  func.func @transform_2(%arg0: i32) -> (i32, i32) {
    %c0_i32 = arith.constant 0 : i32
    %c0_i32_0 = arith.constant 0 : i32
    %c0_i32_1 = arith.constant 0 : i32
    return %c0_i32, %c0_i32_0 : i32, i32
  }
  func.func @transform_3(%arg0: i32) -> (i32, i32) {
    %c0_i32 = arith.constant 0 : i32
    %c0_i32_0 = arith.constant 0 : i32
    return %arg0, %c0_i32 : i32, i32
  }
}

</mosaic_0001>

<llo_original>
// kernel: transformer_forward.11
$region0: #{transformer_forward.11}
  #allocation0 [shape = 'u32[]', space=smem, size = 0x4, offset = 0x4, fixed_abs, tag = 'smem constant byte address 0x4 - core index']
  #allocation1 [shape = 'u32[144,128]{1,0:T(1,128)}', space=vmem, size = 0x12000, scoped, tag = 'internal scratch']
  %s0 = inlined_call_operand.vmem [shape: f32[16,32], index: 0, kind: input, shape index: {}]
  %s1 = inlined_call_operand.vmem [shape: f32[1,32], index: 1, kind: input, shape index: {}]
  %s2 = inlined_call_operand.vmem [shape: f32[1,32], index: 2, kind: input, shape index: {}]
  %s3 = inlined_call_operand.vmem [shape: bf16[32,96], index: 3, kind: input, shape index: {}]
  %s4 = inlined_call_operand.vmem [shape: f32[1,96], index: 4, kind: input, shape index: {}]
  %s5 = inlined_call_operand.vmem [shape: bf16[16,96], index: 5, kind: output, shape index: {}]
  %s6 = sld [smem:[#allocation0]]
  $region30: #{transformer_forward.11} parent=0
    _
  %s8 = ssub.s32 1, %s6
  %s9 = scalar_select 0, %s8, %s6
  // Predicated region
  $region2: #{transformer_forward.11} parent=0 // pred_check
    _
  $region3: #{transformer_forward.11} parent=0 // pred_check_branch
    %11 = sbr.rel (0) target = $region5
  $region4: #{transformer_forward.11} parent=0 // pred_region
    _
  $region5: #{transformer_forward.11} parent=0 // pred_fallthru
    _
  // Predicated region
  $region6: #{transformer_forward.11} parent=0 // pred_check
    _
  $region7: #{transformer_forward.11} parent=0 // pred_check_branch
    %13 = sbr.rel (0) target = $region9
  $region8: #{transformer_forward.11} parent=0 // pred_region
    _
  $region9: #{transformer_forward.11} parent=0 // pred_fallthru
    _
  // Predicated region
  $region10: #{transformer_forward.11} parent=0 // pred_check
    _
  $region11: #{transformer_forward.11} parent=0 // pred_check_branch
    %15 = sbr.rel (0) target = $region13
  $region12: #{transformer_forward.11} parent=0 // pred_region
    _
  $region13: #{transformer_forward.11} parent=0 // pred_fallthru
    _
  // Predicated region
  $region14: #{transformer_forward.11} parent=0 // pred_check
    _
  $region15: #{transformer_forward.11} parent=0 // pred_check_branch
    %17 = sbr.rel (0) target = $region17
  $region16: #{transformer_forward.11} parent=0 // pred_region
    _
  $region17: #{transformer_forward.11} parent=0 // pred_fallthru
    _
  // Predicated region
  $region18: #{transformer_forward.11} parent=0 // pred_check
    _
  $region19: #{transformer_forward.11} parent=0 // pred_check_branch
    %19 = sbr.rel (0) target = $region21
  $region20: #{transformer_forward.11} parent=0 // pred_region
    _
  $region21: #{transformer_forward.11} parent=0 // pred_fallthru
    _
  %v21 = vld [vmem:[%s0] sm:$0xff]
  %v22 = vld [vmem:[%s0 + $0x8] sm:$0xff]
  %vm23 = vcmask 261120
  %v24 = vsel %vm23, %v21, 0.0
  %25 = vadd.xlane.f32.xlu0 %v24
  %v26 = vpop.xlane.xlu0 %25
  %v27 = vsel %vm23, %v22, 0.0
  %28 = vadd.xlane.f32.xlu0 %v27
  %v29 = vpop.xlane.xlu0 %28
  %v30 = vrcp.pop 32.0
  %v31 = vmul.f32 %v26, %v30
  %v32 = vmul.f32 %v29, %v30
  %v33 = vsub.f32 %v21, %v31
  %v34 = vsub.f32 %v22, %v32
  %v35 = vmul.f32 %v33, %v33
  %v36 = vmul.f32 %v34, %v34
  %v37 = vsel %vm23, %v35, 0.0
  %38 = vadd.xlane.f32.xlu0 %v37
  %v39 = vpop.xlane.xlu0 %38
  %v40 = vsel %vm23, %v36, 0.0
  %41 = vadd.xlane.f32.xlu0 %v40
  %v42 = vpop.xlane.xlu0 %41
  %v43 = vmul.f32 %v39, %v30
  %v44 = vmul.f32 %v42, %v30
  %v45 = vadd.f32 %v43, 1e-05
  %v46 = vadd.f32 %v44, 1e-05
  %v47 = vrsqrt.pop %v45
  %v48 = vrsqrt.pop %v46
  %v49 = vmul.f32 %v33, %v47
  %v50 = vmul.f32 %v34, %v48
  %v51 = vld [vmem:[%s1] sm:$0x1]
  %v53 = vlaneseq
  %v54 = vshrl.u32 %v53, 7
  %v55 = vsub.s32 0, %v54
  %v56 = vrot.slane %v51, %v55
  %v58 = vmul.f32 %v49, %v56
  %v59 = vmul.f32 %v50, %v56
  %v60 = vld [vmem:[%s2] sm:$0x1]
  %v62 = vlaneseq
  %v63 = vshrl.u32 %v62, 7
  %v64 = vsub.s32 0, %v63
  %v65 = vrot.slane %v60, %v64
  %v67 = vadd.f32 %v58, %v65
  %v68 = vadd.f32 %v59, %v65
  %v69 = vpack.c.bf16 %v68, %v67
  %v70 = vld [vmem:[%s3] sm:$0xf]
  %v71 = vld [vmem:[%s3 + $0x4] sm:$0xf]
  %v72 = vld [vmem:[%s3 + $0x8] sm:$0xf]
  %v73 = vld [vmem:[%s3 + $0xc] sm:$0xf]
  %v74 = vld [vmem:[%s4] sm:$0x1]
  %v76 = vlaneseq
  %v77 = vshrl.u32 %v76, 7
  %v78 = vsub.s32 0, %v77
  %v79 = vrot.slane %v74, %v78
  %v85 = vunpack.c.l.b16 %v70
  %v86 = vunpack.c.l.b16 %v71
  %v87 = vunpack.c.l.b16 %v72
  %v88 = vunpack.c.l.b16 %v73
  %v89 = vpack.c.b16 %v86, %v85
  %v90 = vpack.c.b16 %v88, %v87
  %v94 = vsel %vm23, %v69, 0
  %96 = vmatprep.subr.bf16.mxu0 0
  %97 = vmatpush1.bf16.msra.mxu0 %v89
  %98 = vmatprep.subr.bf16.mxu0 0
  %99 = vmatpush1.bf16.msra.mxu0 %v90
  %100 = vmatprep.subr.bf16.mxu0 0
  %101 = vmatpush1.bf16.msra.mxu0 0
  %102 = vmatprep.subr.bf16.mxu0 0
  %103 = vmatpush1.bf16.msra.mxu0 0
  %104 = vmatprep.subr.bf16.mxu0 0
  %105 = vmatpush1.bf16.msra.mxu0 0
  %106 = vmatprep.subr.bf16.mxu0 0
  %107 = vmatpush1.bf16.msra.mxu0 0
  %108 = vmatprep.subr.bf16.mxu0 0
  %109 = vmatpush1.bf16.msra.mxu0 0
  %110 = vmatprep.subr.bf16.mxu0 0
  %111 = vmatpush1.bf16.msra.mxu0 0
  %112 = vmatprep.subr.bf16.mxu0 0
  %113 = vmatpush1.bf16.msra.mxu0 0
  %114 = vmatprep.subr.bf16.mxu0 0
  %115 = vmatpush1.bf16.msra.mxu0 0
  %116 = vmatprep.subr.bf16.mxu0 0
  %117 = vmatpush1.bf16.msra.mxu0 0
  %118 = vmatprep.subr.bf16.mxu0 0
  %119 = vmatpush1.bf16.msra.mxu0 0
  %120 = vmatprep.subr.bf16.mxu0 0
  %121 = vmatpush1.bf16.msra.mxu0 0
  %122 = vmatprep.subr.bf16.mxu0 0
  %123 = vmatpush1.bf16.msra.mxu0 0
  %124 = vmatprep.subr.bf16.mxu0 0
  %125 = vmatpush1.bf16.msra.mxu0 0
  %126 = vmatprep.subr.bf16.mxu0 0
  %127 = vmatpush1.bf16.msra.mxu0 0
  %128 = vmatprep.mubr.bf16.mxu0 0
  %129 = vmatmul.mubr.bf16.gmra.mrb[0].mxu0 %v94
  %v130 = vpop.f32.mrb[0].mxu0
  %v131 = vadd.f32 %v79, %v130
  %v132 = vpop.f32.mrb[0].mxu0
  %v133 = vpop.f32.mrb[0].mxu0
  %v134 = vadd.f32 %v79, %v133
  %v135 = vpop.f32.mrb[0].mxu0
  %136 = vdwg.mxu0
  %v137 = vpack.c.bf16 %v134, %v131
  %v139 = vunpack.c.l.b16 %v137
  %v140 = vunpack.c.h.b16 %v137
  %v141 = vpack.c.b16 %v139, %v139
  %v142 = vpack.c.b16 %v140, %v140
  %vm145 = vcmask 781312
  %146 = vst.msk [vmem:[%s5] sm:$0xf] %vm145, %v141
  %147 = vst.msk [vmem:[%s5 + $0x4] sm:$0xf] %vm145, %v142
  // Predicated region
  $region22: #{transformer_forward.11} parent=0 // pred_check
    _
  $region23: #{transformer_forward.11} parent=0 // pred_check_branch
    %149 = sbr.rel (0) target = $region25
  $region24: #{transformer_forward.11} parent=0 // pred_region
    _
  $region25: #{transformer_forward.11} parent=0 // pred_fallthru
    _
  // Predicated region
  $region26: #{transformer_forward.11} parent=0 // pred_check
    _
  $region27: #{transformer_forward.11} parent=0 // pred_check_branch
    %151 = sbr.rel (0) target = $region29
  $region28: #{transformer_forward.11} parent=0 // pred_region
    _
  $region29: #{transformer_forward.11} parent=0 // pred_fallthru
    _

// kernel: transformer_forward.12
$region0: #{transformer_forward.12}
  #allocation0 [shape = 'u32[]', space=smem, size = 0x4, offset = 0x4, fixed_abs, tag = 'smem constant byte address 0x4 - core index']
  #allocation1 [shape = 'u32[144,128]{1,0:T(1,128)}', space=vmem, size = 0x12000, scoped, tag = 'internal scratch']
  %s0 = inlined_call_operand.vmem [shape: bf16[3,2,4,8,8], index: 0, kind: input, shape index: {}]
  %s1 = inlined_call_operand.vmem [shape: bf16[2,8,32], index: 1, kind: output, shape index: {}]
  %s2 = sld [smem:[#allocation0]]
  $region78: #{transformer_forward.12} parent=0
    _
  %s4 = ssub.s32 1, %s2
  %s5 = scalar_select 0, %s4, %s2
  $region1: #{transformer_forward.12} parent=0
    #allocation2 [shape = 'u8[49152]{0}', space=vmem, size = 0xc000, scoped, tag = 'input window, operand 0']
    loop: start=0, step=1, limit=4
    $region2: #{transformer_forward.12} parent=1 // loop_pre_header
      _
    $region3: #{transformer_forward.12} parent=1 // loop_header
      %s7 = sphi 0, %s11
      %p8 = scmp.ge.s32.totalorder %s7, 4
      %s14 = sphi 0, %s26
      %s15 = sphi 0, %s22
      %s16 = sphi 0, %s14
      %s17 = sphi 0, %s15
      %s18 = sphi 0, %s16
      %s19 = sphi 0, %s17
      %s31 = sphi 0, %s33
      %s34 = sphi 0, %s31
      %s35 = sphi 0, %s34
      %s51 = sphi 0, %s35
      %s59 = sphi 0, %s61
      %s62 = sphi 0, %s59
      %s63 = sphi 0, %s62
      %s79 = sphi 0, %s63
    $region4: #{transformer_forward.12} parent=1 // loop_header_branch
      %10 = sbr.rel (%p8) target = $region8
    $region5: #{transformer_forward.12} parent=1 // loop_body
      %s12 = ssub.s32 %s7, 1
      %s13 = ssub.s32 %s7, 2
      %s20 = sadd.s32 1, %s15
      %p21 = scmp.ge.s32.totalorder %s20, 1
      %s22 = scalar_select %p21, 0, %s20
      %s23 = sadd.s32 1, %s14
      %s24 = scalar_select %p21, %s23, %s14
      %p25 = scmp.ge.s32.totalorder %s24, 2
      %s26 = scalar_select %p25, 0, %s24
      %s27 = ssub.s32 %s14, %s26
      %s28 = ssub.s32 %s15, %s22
      %s29 = sor.u32 %s27, %s28
      %p30 = scmp.eq.s32.totalorder %s29, 0
      %s32 = sadd.s32 %s31, 1
      %s33 = scalar_select %p30, %s31, %s32
      %p36 = pneg %p30
      %p37 = scmp.eq.s32.totalorder %s7, 1
      %p38 = por %p36, %p37
      %p39 = scmp.ne.s32.totalorder %s31, %s34
      %p40 = scmp.eq.s32.totalorder %s7, 0
      %p41 = por %p39, %p40
      %p42 = scmp.ne.s32.totalorder %s31, %s34
      %p43 = scmp.eq.s32.totalorder %s12, 1
      %p44 = por %p42, %p43
      %p45 = scmp.ne.s32.totalorder %s34, %s35
      %p46 = scmp.eq.s32.totalorder %s12, 0
      %p47 = por %p45, %p46
      %p48 = scmp.ne.s32.totalorder %s34, %s35
      %p49 = scmp.eq.s32.totalorder %s13, 1
      %p50 = por %p48, %p49
      %p52 = scmp.ne.s32.totalorder %s35, %s51
      %p53 = scmp.eq.s32.totalorder %s13, 0
      %p54 = por %p52, %p53
      %s55 = ssub.s32 %s14, %s26
      %s56 = ssub.s32 %s15, %s22
      %s57 = sor.u32 %s55, %s56
      %p58 = scmp.eq.s32.totalorder %s57, 0
      %s60 = sadd.s32 %s59, 1
      %s61 = scalar_select %p58, %s59, %s60
      %p64 = pneg %p58
      %p65 = scmp.eq.s32.totalorder %s7, 1
      %p66 = por %p64, %p65
      %p67 = scmp.ne.s32.totalorder %s59, %s62
      %p68 = scmp.eq.s32.totalorder %s7, 0
      %p69 = por %p67, %p68
      %p70 = scmp.ne.s32.totalorder %s59, %s62
      %p71 = scmp.eq.s32.totalorder %s12, 1
      %p72 = por %p70, %p71
      %p73 = scmp.ne.s32.totalorder %s62, %s63
      %p74 = scmp.eq.s32.totalorder %s12, 0
      %p75 = por %p73, %p74
      %p76 = scmp.ne.s32.totalorder %s62, %s63
      %p77 = scmp.eq.s32.totalorder %s13, 1
      %p78 = por %p76, %p77
      %p80 = scmp.ne.s32.totalorder %s63, %s79
      %p81 = scmp.eq.s32.totalorder %s13, 0
      %p82 = por %p80, %p81
      %p83 = scmp.le.s32.totalorder 1, %s7
      %p84 = scmp.lt.s32.totalorder %s7, 3
      %p85 = pnand %p83, %p84
      %p86 = pneg %p85
      // Predicated region
      $region9: #{transformer_forward.12} parent=5 // pred_check
        _
      $region10: #{transformer_forward.12} parent=5 // pred_check_branch
        %88 = sbr.rel (%p85) target = $region12
      $region11: #{transformer_forward.12} parent=5 // pred_region
        %s89 = ssub.s32 %s7, 1
      $region12: #{transformer_forward.12} parent=5 // pred_fallthru
        _
      %p90 = scmp.lt.s32.totalorder %s7, 2
      // Predicated region
      $region13: #{transformer_forward.12} parent=5 // pred_check
        %p91 = pneg %p90
      $region14: #{transformer_forward.12} parent=5 // pred_check_branch
        %93 = sbr.rel (%p91) target = $region16
      $region15: #{transformer_forward.12} parent=5 // pred_region
        // Predicated region
        $region17: #{transformer_forward.12} parent=15 // pred_check
          %p94 = pneg %p41
        $region18: #{transformer_forward.12} parent=15 // pred_check_branch
          %96 = sbr.rel (%p94) target = $region20
        $region19: #{transformer_forward.12} parent=15 // pred_region
          %s97 = sand.u32 %s31, 1
          %s98 = sand.u32 %s31, 1
          %s99 = smul.addr %s98, 48
          %s100 = scalar_lea.vmem [#allocation2], %s99
          %s101 = smul.u32 4, %s15
          %s102 = smul.addr %s14, 4
          %s103 = sadd.s32 %s101, %s102
          %s104 = smul.addr %s103, 4
          %s105 = scalar_lea.vmem %s0, %s104
          // Predicated region
          $region21: #{transformer_forward.12} parent=19 // pred_check
            _
          $region22: #{transformer_forward.12} parent=19 // pred_check_branch
            %107 = sbr.rel (0) target = $region24
          $region23: #{transformer_forward.12} parent=19 // pred_region
            // Predicated region
            $region25: #{transformer_forward.12} parent=23 // pred_check
              _
            $region26: #{transformer_forward.12} parent=23 // pred_check_branch
              %109 = sbr.rel target = $region28
            $region27: #{transformer_forward.12} parent=23 // pred_region
              // Predicated region
              $region40: #{transformer_forward.12} parent=27 // pred_check
                _
              $region41: #{transformer_forward.12} parent=27 // pred_check_branch
                %146 = sbr.rel (0) target = $region43
              $region42: #{transformer_forward.12} parent=27 // pred_region
                loop: start=0, step=1, limit=1
                $region44: #{transformer_forward.12} parent=42 // loop_pre_header
                  _
                $region45: #{transformer_forward.12} parent=42 // loop_header
                  %s148 = sphi 0, %s152
                  %p149 = scmp.ge.s32.totalorder %s148, 1
                  %s153 = sphi %s105, %s105
                  %s154 = sphi %s100, %s100
                $region46: #{transformer_forward.12} parent=42 // loop_header_branch
                  %151 = sbr.rel (%p149) target = $region50
                $region47: #{transformer_forward.12} parent=42 // loop_body
                  _
                $region48: #{transformer_forward.12} parent=42 // loop_footer
                  %s152 = sadd.s32 1, %s148
                $region49: #{transformer_forward.12} parent=42 // loop_footer_branch
                  %147 = sbr.rel target = $region45
                $region50: #{transformer_forward.12} parent=42 // loop_exit
                  _
                loop: start=0, step=1, limit=1
                $region51: #{transformer_forward.12} parent=42 // loop_pre_header
                  _
                $region52: #{transformer_forward.12} parent=42 // loop_header
                  %s157 = sphi 0, %s161
                  %p158 = scmp.ge.s32.totalorder %s157, 1
                  %s162 = sphi %s105, %s105
                  %s163 = sphi %s100, %s100
                $region53: #{transformer_forward.12} parent=42 // loop_header_branch
                  %160 = sbr.rel (%p158) target = $region57
                $region54: #{transformer_forward.12} parent=42 // loop_body
                  %v164 = vld [vmem:[%s162] sm:$0xf]
                  %165 = vst [vmem:[%s163] sm:$0xf] %v164
                  %v166 = vld [vmem:[%s162 + $0x4] sm:$0xf]
                  %167 = vst [vmem:[%s163 + $0x4] sm:$0xf] %v166
                  %v168 = vld [vmem:[%s162 + $0x8] sm:$0xf]
                  %169 = vst [vmem:[%s163 + $0x8] sm:$0xf] %v168
                  %v170 = vld [vmem:[%s162 + $0xc] sm:$0xf]
                  %171 = vst [vmem:[%s163 + $0xc] sm:$0xf] %v170
                  %v172 = vld [vmem:[%s162 + $0x20] sm:$0xf]
                  %173 = vst [vmem:[%s163 + $0x10] sm:$0xf] %v172
                  %v174 = vld [vmem:[%s162 + $0x24] sm:$0xf]
                  %175 = vst [vmem:[%s163 + $0x14] sm:$0xf] %v174
                  %v176 = vld [vmem:[%s162 + $0x28] sm:$0xf]
                  %177 = vst [vmem:[%s163 + $0x18] sm:$0xf] %v176
                  %v178 = vld [vmem:[%s162 + $0x2c] sm:$0xf]
                  %179 = vst [vmem:[%s163 + $0x1c] sm:$0xf] %v178
                  %v180 = vld [vmem:[%s162 + $0x40] sm:$0xf]
                  %181 = vst [vmem:[%s163 + $0x20] sm:$0xf] %v180
                  %v182 = vld [vmem:[%s162 + $0x44] sm:$0xf]
                  %183 = vst [vmem:[%s163 + $0x24] sm:$0xf] %v182
                  %v184 = vld [vmem:[%s162 + $0x48] sm:$0xf]
                  %185 = vst [vmem:[%s163 + $0x28] sm:$0xf] %v184
                  %v186 = vld [vmem:[%s162 + $0x4c] sm:$0xf]
                  %187 = vst [vmem:[%s163 + $0x2c] sm:$0xf] %v186
                $region55: #{transformer_forward.12} parent=42 // loop_footer
                  %s161 = sadd.s32 1, %s157
                $region56: #{transformer_forward.12} parent=42 // loop_footer_branch
                  %156 = sbr.rel target = $region52
                $region57: #{transformer_forward.12} parent=42 // loop_exit
                  _
              $region43: #{transformer_forward.12} parent=27 // pred_fallthru
                _
            $region28: #{transformer_forward.12} parent=23 // pred_fallthru
              _
            // Predicated region
            $region29: #{transformer_forward.12} parent=23 // pred_check
              _
            $region30: #{transformer_forward.12} parent=23 // pred_check_branch
              %111 = sbr.rel (0) target = $region32
            $region31: #{transformer_forward.12} parent=23 // pred_region
              loop: start=0, step=1, limit=1
              $region33: #{transformer_forward.12} parent=31 // loop_pre_header
                _
              $region34: #{transformer_forward.12} parent=31 // loop_header
                %s114 = sphi 0, %s118
                %p115 = scmp.ge.s32.totalorder %s114, 1
                %s119 = sphi %s105, %s105
                %s120 = sphi %s100, %s100
              $region35: #{transformer_forward.12} parent=31 // loop_header_branch
                %117 = sbr.rel (%p115) target = $region39
              $region36: #{transformer_forward.12} parent=31 // loop_body
                %v121 = vld [vmem:[%s119] sm:$0xf]
                %122 = vst [vmem:[%s120] sm:$0xf] %v121
                %v123 = vld [vmem:[%s119 + $0x4] sm:$0xf]
                %124 = vst [vmem:[%s120 + $0x4] sm:$0xf] %v123
                %v125 = vld [vmem:[%s119 + $0x8] sm:$0xf]
                %126 = vst [vmem:[%s120 + $0x8] sm:$0xf] %v125
                %v127 = vld [vmem:[%s119 + $0xc] sm:$0xf]
                %128 = vst [vmem:[%s120 + $0xc] sm:$0xf] %v127
                %v129 = vld [vmem:[%s119 + $0x20] sm:$0xf]
                %130 = vst [vmem:[%s120 + $0x10] sm:$0xf] %v129
                %v131 = vld [vmem:[%s119 + $0x24] sm:$0xf]
                %132 = vst [vmem:[%s120 + $0x14] sm:$0xf] %v131
                %v133 = vld [vmem:[%s119 + $0x28] sm:$0xf]
                %134 = vst [vmem:[%s120 + $0x18] sm:$0xf] %v133
                %v135 = vld [vmem:[%s119 + $0x2c] sm:$0xf]
                %136 = vst [vmem:[%s120 + $0x1c] sm:$0xf] %v135
                %v137 = vld [vmem:[%s119 + $0x40] sm:$0xf]
                %138 = vst [vmem:[%s120 + $0x20] sm:$0xf] %v137
                %v139 = vld [vmem:[%s119 + $0x44] sm:$0xf]
                %140 = vst [vmem:[%s120 + $0x24] sm:$0xf] %v139
                %v141 = vld [vmem:[%s119 + $0x48] sm:$0xf]
                %142 = vst [vmem:[%s120 + $0x28] sm:$0xf] %v141
                %v143 = vld [vmem:[%s119 + $0x4c] sm:$0xf]
                %144 = vst [vmem:[%s120 + $0x2c] sm:$0xf] %v143
              $region37: #{transformer_forward.12} parent=31 // loop_footer
                %s118 = sadd.s32 1, %s114
              $region38: #{transformer_forward.12} parent=31 // loop_footer_branch
                %113 = sbr.rel target = $region34
              $region39: #{transformer_forward.12} parent=31 // loop_exit
                _
            $region32: #{transformer_forward.12} parent=23 // pred_fallthru
              _
          $region24: #{transformer_forward.12} parent=19 // pred_fallthru
            _
          %188 = vnop
        $region20: #{transformer_forward.12} parent=15 // pred_fallthru
          _
      $region16: #{transformer_forward.12} parent=5 // pred_fallthru
        _
      %p189 = scmp.le.s32.totalorder 1, %s7
      %p190 = scmp.lt.s32.totalorder %s7, 3
      %p191 = pnand %p189, %p190
      %p192 = pneg %p191
      // Predicated region
      $region58: #{transformer_forward.12} parent=5 // pred_check
        _
      $region59: #{transformer_forward.12} parent=5 // pred_check_branch
        %194 = sbr.rel (%p191) target = $region61
      $region60: #{transformer_forward.12} parent=5 // pred_region
        %s195 = ssub.s32 %s7, 1
        %s196 = sand.u32 %s34, 1
        %s197 = sand.u32 %s34, 1
        %s198 = smul.addr %s197, 48
        %s199 = scalar_lea.vmem [#allocation2], %s198
        // Predicated region
        $region62: #{transformer_forward.12} parent=60 // pred_check
          %p200 = pneg %p47
        $region63: #{transformer_forward.12} parent=60 // pred_check_branch
          %202 = sbr.rel (%p200) target = $region65
        $region64: #{transformer_forward.12} parent=60 // pred_region
          _
        $region65: #{transformer_forward.12} parent=60 // pred_fallthru
          _
        %s203 = sand.u32 %s34, 1
        %s204 = sand.u32 %s34, 1
        %s205 = smul.addr %s204, 48
        %s206 = scalar_lea.vmem [#allocation2], %s205
        %p207 = pneg %p47
        %p208 = pneg %p44
        %p209 = pneg %p75
        %p210 = pneg %p72
        %p211 = scmp.lt.s32.totalorder %s16, 1
        %s212 = scalar_select %p211, %s16, 1
        %p213 = scmp.lt.s32.totalorder %s17, 0
        %s214 = scalar_select %p213, %s17, 0
        %s215 = sadd.s32 %s214, %s212
        %s216 = smul.addr %s215, 4
        %s217 = scalar_lea.vmem %s1, %s216
        %s218 = smul.u32 4, %s17
        %p219 = scmp.lt.s32.totalorder %s16, 1
        %s220 = scalar_select %p219, %s16, 1
        %p221 = scmp.lt.s32.totalorder %s17, 0
        %s222 = scalar_select %p221, %s17, 0
        %s223 = sadd.s32 %s222, %s220
        %s224 = smul.addr %s223, 4
        %s225 = scalar_lea.vmem %s1, %s224
        %v227 = vlaneseq
        %v228 = vshrl.u32 %v227, 7
        %v229 = vlaneseq
        %v230 = vand.u32 %v229, 127
        %vm231 = vcmp.le.s32.totalorder %v230, %v228
        %v232 = vld [vmem:[%s199] sm:$0xf]
        %v233 = vunpack.c.l.bf16 %v232
        %v234 = vmul.f32 %v233, 0.35355338
        %v235 = vpack.c.bf16 %v234, %v234
        %s236 = scalar_lea.vmem %s199, 16 [#allocation2]
        %v237 = vld [vmem:[%s236] sm:$0xf]
        %s238 = scalar_lea.vmem %s199, 32 [#allocation2]
        %v239 = vld [vmem:[%s238] sm:$0xf]
        %vm240 = vcmask 64512
        %v242 = vsel %vm240, %v235, 0
        %v245 = vsel %vm240, %v237, 0
        %247 = vmatprep.subr.bf16.mxu0 0
        %248 = vmatpush1.bf16.xpose.msra.mxu0 %v245
        %249 = vmatprep.subr.bf16.mxu0 0
        %250 = vmatpush1.bf16.xpose.msra.mxu0 0
        %251 = vmatprep.subr.bf16.mxu0 0
        %252 = vmatpush1.bf16.xpose.msra.mxu0 0
        %253 = vmatprep.subr.bf16.mxu0 0
        %254 = vmatpush1.bf16.xpose.msra.mxu0 0
        %255 = vmatprep.subr.bf16.mxu0 0
        %256 = vmatpush1.bf16.xpose.msra.mxu0 0
        %257 = vmatprep.subr.bf16.mxu0 0
        %258 = vmatpush1.bf16.xpose.msra.mxu0 0
        %259 = vmatprep.subr.bf16.mxu0 0
        %260 = vmatpush1.bf16.xpose.msra.mxu0 0
        %261 = vmatprep.subr.bf16.mxu0 0
        %262 = vmatpush1.bf16.xpose.msra.mxu0 0
        %263 = vmatprep.subr.bf16.mxu0 0
        %264 = vmatpush1.bf16.xpose.msra.mxu0 0
        %265 = vmatprep.subr.bf16.mxu0 0
        %266 = vmatpush1.bf16.xpose.msra.mxu0 0
        %267 = vmatprep.subr.bf16.mxu0 0
        %268 = vmatpush1.bf16.xpose.msra.mxu0 0
        %269 = vmatprep.subr.bf16.mxu0 0
        %270 = vmatpush1.bf16.xpose.msra.mxu0 0
        %271 = vmatprep.subr.bf16.mxu0 0
        %272 = vmatpush1.bf16.xpose.msra.mxu0 0
        %273 = vmatprep.subr.bf16.mxu0 0
        %274 = vmatpush1.bf16.xpose.msra.mxu0 0
        %275 = vmatprep.subr.bf16.mxu0 0
        %276 = vmatpush1.bf16.xpose.msra.mxu0 0
        %277 = vmatprep.subr.bf16.mxu0 0
        %278 = vmatpush1.bf16.xpose.msra.mxu0 0
        %279 = vmatprep.mubr.bf16.mxu0 0
        %280 = vmatmul.mubr.bf16.gmra.mrb[0].mxu0 %v242
        %v281 = vpop.f32.mrb[0].mxu0
        %v282 = vadd.f32 0.0, %v281
        %v283 = vpop.f32.mrb[0].mxu0
        %v284 = vpop.f32.mrb[0].mxu0
        %v285 = vpop.f32.mrb[0].mxu0
        %286 = vdwg.mxu0
        %v287 = vsel %vm231, %v282, -1e+30
        %v288 = vsel %vm240, %v287, -inf
        %289 = vmax.xlane.f32.xlu0 %v288
        %v290 = vpop.xlane.xlu0 %289
        %v291 = vsub.f32 %v287, %v290
        %v292 = vmul.f32 %v291, 1.442695
        %v293 = vpow.pop %v292
        %v294 = vsel %vm240, %v293, 0.0
        %295 = vadd.xlane.f32.xlu0 %v294
        %v296 = vpop.xlane.xlu0 %295
        %v297 = vrcp.pop %v296
        %v298 = vmul.f32 %v293, %v297
        %v299 = vpack.c.bf16 %v298, %v298
        %v301 = vsel %vm240, %v299, 0
        %vm303 = vcmask 1043456
        %v305 = vsel %vm303, %v239, 0
        %307 = vmatprep.subr.bf16.mxu0 0
        %308 = vmatpush1.bf16.msra.mxu0 %v305
        %309 = vmatprep.subr.bf16.mxu0 0
        %310 = vmatpush1.bf16.msra.mxu0 0
        %311 = vmatprep.subr.bf16.mxu0 0
        %312 = vmatpush1.bf16.msra.mxu0 0
        %313 = vmatprep.subr.bf16.mxu0 0
        %314 = vmatpush1.bf16.msra.mxu0 0
        %315 = vmatprep.subr.bf16.mxu0 0
        %316 = vmatpush1.bf16.msra.mxu0 0
        %317 = vmatprep.subr.bf16.mxu0 0
        %318 = vmatpush1.bf16.msra.mxu0 0
        %319 = vmatprep.subr.bf16.mxu0 0
        %320 = vmatpush1.bf16.msra.mxu0 0
        %321 = vmatprep.subr.bf16.mxu0 0
        %322 = vmatpush1.bf16.msra.mxu0 0
        %323 = vmatprep.subr.bf16.mxu0 0
        %324 = vmatpush1.bf16.msra.mxu0 0
        %325 = vmatprep.subr.bf16.mxu0 0
        %326 = vmatpush1.bf16.msra.mxu0 0
        %327 = vmatprep.subr.bf16.mxu0 0
        %328 = vmatpush1.bf16.msra.mxu0 0
        %329 = vmatprep.subr.bf16.mxu0 0
        %330 = vmatpush1.bf16.msra.mxu0 0
        %331 = vmatprep.subr.bf16.mxu0 0
        %332 = vmatpush1.bf16.msra.mxu0 0
        %333 = vmatprep.subr.bf16.mxu0 0
        %334 = vmatpush1.bf16.msra.mxu0 0
        %335 = vmatprep.subr.bf16.mxu0 0
        %336 = vmatpush1.bf16.msra.mxu0 0
        %337 = vmatprep.subr.bf16.mxu0 0
        %338 = vmatpush1.bf16.msra.mxu0 0
        %339 = vmatprep.mubr.bf16.mxu0 0
        %340 = vmatmul.mubr.bf16.gmra.mrb[0].mxu0 %v301
        %v341 = vpop.f32.mrb[0].mxu0
        %v342 = vadd.f32 0.0, %v341
        %v343 = vpop.f32.mrb[0].mxu0
        %v344 = vpop.f32.mrb[0].mxu0
        %v345 = vpop.f32.mrb[0].mxu0
        %346 = vdwg.mxu0
        %s347 = scalar_lea.vmem %s199, 4 [#allocation2]
        %v348 = vld [vmem:[%s347] sm:$0xf]
        %v349 = vunpack.c.l.bf16 %v348
        %v350 = vmul.f32 %v349, 0.35355338
        %v351 = vpack.c.bf16 %v350, %v350
        %s352 = scalar_lea.vmem %s199, 20 [#allocation2]
        %v353 = vld [vmem:[%s352] sm:$0xf]
        %s354 = scalar_lea.vmem %s199, 36 [#allocation2]
        %v355 = vld [vmem:[%s354] sm:$0xf]
        %v357 = vsel %vm240, %v351, 0
        %v360 = vsel %vm240, %v353, 0
        %362 = vmatprep.subr.bf16.mxu0 0
        %363 = vmatpush1.bf16.xpose.msra.mxu0 %v360
        %364 = vmatprep.subr.bf16.mxu0 0
        %365 = vmatpush1.bf16.xpose.msra.mxu0 0
        %366 = vmatprep.subr.bf16.mxu0 0
        %367 = vmatpush1.bf16.xpose.msra.mxu0 0
        %368 = vmatprep.subr.bf16.mxu0 0
        %369 = vmatpush1.bf16.xpose.msra.mxu0 0
        %370 = vmatprep.subr.bf16.mxu0 0
        %371 = vmatpush1.bf16.xpose.msra.mxu0 0
        %372 = vmatprep.subr.bf16.mxu0 0
        %373 = vmatpush1.bf16.xpose.msra.mxu0 0
        %374 = vmatprep.subr.bf16.mxu0 0
        %375 = vmatpush1.bf16.xpose.msra.mxu0 0
        %376 = vmatprep.subr.bf16.mxu0 0
        %377 = vmatpush1.bf16.xpose.msra.mxu0 0
        %378 = vmatprep.subr.bf16.mxu0 0
        %379 = vmatpush1.bf16.xpose.msra.mxu0 0
        %380 = vmatprep.subr.bf16.mxu0 0
        %381 = vmatpush1.bf16.xpose.msra.mxu0 0
        %382 = vmatprep.subr.bf16.mxu0 0
        %383 = vmatpush1.bf16.xpose.msra.mxu0 0
        %384 = vmatprep.subr.bf16.mxu0 0
        %385 = vmatpush1.bf16.xpose.msra.mxu0 0
        %386 = vmatprep.subr.bf16.mxu0 0
        %387 = vmatpush1.bf16.xpose.msra.mxu0 0
        %388 = vmatprep.subr.bf16.mxu0 0
        %389 = vmatpush1.bf16.xpose.msra.mxu0 0
        %390 = vmatprep.subr.bf16.mxu0 0
        %391 = vmatpush1.bf16.xpose.msra.mxu0 0
        %392 = vmatprep.subr.bf16.mxu0 0
        %393 = vmatpush1.bf16.xpose.msra.mxu0 0
        %394 = vmatprep.mubr.bf16.mxu0 0
        %395 = vmatmul.mubr.bf16.gmra.mrb[0].mxu0 %v357
        %v396 = vpop.f32.mrb[0].mxu0
        %v397 = vadd.f32 0.0, %v396
        %v398 = vpop.f32.mrb[0].mxu0
        %v399 = vpop.f32.mrb[0].mxu0
        %v400 = vpop.f32.mrb[0].mxu0
        %401 = vdwg.mxu0
        %v402 = vsel %vm231, %v397, -1e+30
        %v403 = vsel %vm240, %v402, -inf
        %404 = vmax.xlane.f32.xlu0 %v403
        %v405 = vpop.xlane.xlu0 %404
        %v406 = vsub.f32 %v402, %v405
        %v407 = vmul.f32 %v406, 1.442695
        %v408 = vpow.pop %v407
        %v409 = vsel %vm240, %v408, 0.0
        %410 = vadd.xlane.f32.xlu0 %v409
        %v411 = vpop.xlane.xlu0 %410
        %v412 = vrcp.pop %v411
        %v413 = vmul.f32 %v408, %v412
        %v414 = vpack.c.bf16 %v413, %v413
        %v416 = vsel %vm240, %v414, 0
        %v419 = vsel %vm303, %v355, 0
        %421 = vmatprep.subr.bf16.mxu0 0
        %422 = vmatpush1.bf16.msra.mxu0 %v419
        %423 = vmatprep.subr.bf16.mxu0 0
        %424 = vmatpush1.bf16.msra.mxu0 0
        %425 = vmatprep.subr.bf16.mxu0 0
        %426 = vmatpush1.bf16.msra.mxu0 0
        %427 = vmatprep.subr.bf16.mxu0 0
        %428 = vmatpush1.bf16.msra.mxu0 0
        %429 = vmatprep.subr.bf16.mxu0 0
        %430 = vmatpush1.bf16.msra.mxu0 0
        %431 = vmatprep.subr.bf16.mxu0 0
        %432 = vmatpush1.bf16.msra.mxu0 0
        %433 = vmatprep.subr.bf16.mxu0 0
        %434 = vmatpush1.bf16.msra.mxu0 0
        %435 = vmatprep.subr.bf16.mxu0 0
        %436 = vmatpush1.bf16.msra.mxu0 0
        %437 = vmatprep.subr.bf16.mxu0 0
        %438 = vmatpush1.bf16.msra.mxu0 0
        %439 = vmatprep.subr.bf16.mxu0 0
        %440 = vmatpush1.bf16.msra.mxu0 0
        %441 = vmatprep.subr.bf16.mxu0 0
        %442 = vmatpush1.bf16.msra.mxu0 0
        %443 = vmatprep.subr.bf16.mxu0 0
        %444 = vmatpush1.bf16.msra.mxu0 0
        %445 = vmatprep.subr.bf16.mxu0 0
        %446 = vmatpush1.bf16.msra.mxu0 0
        %447 = vmatprep.subr.bf16.mxu0 0
        %448 = vmatpush1.bf16.msra.mxu0 0
        %449 = vmatprep.subr.bf16.mxu0 0
        %450 = vmatpush1.bf16.msra.mxu0 0
        %451 = vmatprep.subr.bf16.mxu0 0
        %452 = vmatpush1.bf16.msra.mxu0 0
        %453 = vmatprep.mubr.bf16.mxu0 0
        %454 = vmatmul.mubr.bf16.gmra.mrb[0].mxu0 %v416
        %v455 = vpop.f32.mrb[0].mxu0
        %v456 = vadd.f32 0.0, %v455
        %v457 = vpop.f32.mrb[0].mxu0
        %v458 = vpop.f32.mrb[0].mxu0
        %v459 = vpop.f32.mrb[0].mxu0
        %460 = vdwg.mxu0
        %s461 = scalar_lea.vmem %s199, 8 [#allocation2]
        %v462 = vld [vmem:[%s461] sm:$0xf]
        %v463 = vunpack.c.l.bf16 %v462
        %v464 = vmul.f32 %v463, 0.35355338
        %v465 = vpack.c.bf16 %v464, %v464
        %s466 = scalar_lea.vmem %s199, 24 [#allocation2]
        %v467 = vld [vmem:[%s466] sm:$0xf]
        %s468 = scalar_lea.vmem %s199, 40 [#allocation2]
        %v469 = vld [vmem:[%s468] sm:$0xf]
        %v471 = vsel %vm240, %v465, 0
        %v474 = vsel %vm240, %v467, 0
        %476 = vmatprep.subr.bf16.mxu0 0
        %477 = vmatpush1.bf16.xpose.msra.mxu0 %v474
        %478 = vmatprep.subr.bf16.mxu0 0
        %479 = vmatpush1.bf16.xpose.msra.mxu0 0
        %480 = vmatprep.subr.bf16.mxu0 0
        %481 = vmatpush1.bf16.xpose.msra.mxu0 0
        %482 = vmatprep.subr.bf16.mxu0 0
        %483 = vmatpush1.bf16.xpose.msra.mxu0 0
        %484 = vmatprep.subr.bf16.mxu0 0
        %485 = vmatpush1.bf16.xpose.msra.mxu0 0
        %486 = vmatprep.subr.bf16.mxu0 0
        %487 = vmatpush1.bf16.xpose.msra.mxu0 0
        %488 = vmatprep.subr.bf16.mxu0 0
        %489 = vmatpush1.bf16.xpose.msra.mxu0 0
        %490 = vmatprep.subr.bf16.mxu0 0
        %491 = vmatpush1.bf16.xpose.msra.mxu0 0
        %492 = vmatprep.subr.bf16.mxu0 0
        %493 = vmatpush1.bf16.xpose.msra.mxu0 0
        %494 = vmatprep.subr.bf16.mxu0 0
        %495 = vmatpush1.bf16.xpose.msra.mxu0 0
        %496 = vmatprep.subr.bf16.mxu0 0
        %497 = vmatpush1.bf16.xpose.msra.mxu0 0
        %498 = vmatprep.subr.bf16.mxu0 0
        %499 = vmatpush1.bf16.xpose.msra.mxu0 0
        %500 = vmatprep.subr.bf16.mxu0 0
        %501 = vmatpush1.bf16.xpose.msra.mxu0 0
        %502 = vmatprep.subr.bf16.mxu0 0
        %503 = vmatpush1.bf16.xpose.msra.mxu0 0
        %504 = vmatprep.subr.bf16.mxu0 0
        %505 = vmatpush1.bf16.xpose.msra.mxu0 0
        %506 = vmatprep.subr.bf16.mxu0 0
        %507 = vmatpush1.bf16.xpose.msra.mxu0 0
        %508 = vmatprep.mubr.bf16.mxu0 0
        %509 = vmatmul.mubr.bf16.gmra.mrb[0].mxu0 %v471
        %v510 = vpop.f32.mrb[0].mxu0
        %v511 = vadd.f32 0.0, %v510
        %v512 = vpop.f32.mrb[0].mxu0
        %v513 = vpop.f32.mrb[0].mxu0
        %v514 = vpop.f32.mrb[0].mxu0
        %515 = vdwg.mxu0
        %v516 = vsel %vm231, %v511, -1e+30
        %v517 = vsel %vm240, %v516, -inf
        %518 = vmax.xlane.f32.xlu0 %v517
        %v519 = vpop.xlane.xlu0 %518
        %v520 = vsub.f32 %v516, %v519
        %v521 = vmul.f32 %v520, 1.442695
        %v522 = vpow.pop %v521
        %v523 = vsel %vm240, %v522, 0.0
        %524 = vadd.xlane.f32.xlu0 %v523
        %v525 = vpop.xlane.xlu0 %524
        %v526 = vrcp.pop %v525
        %v527 = vmul.f32 %v522, %v526
        %v528 = vpack.c.bf16 %v527, %v527
        %v530 = vsel %vm240, %v528, 0
        %v533 = vsel %vm303, %v469, 0
        %535 = vmatprep.subr.bf16.mxu0 0
        %536 = vmatpush1.bf16.msra.mxu0 %v533
        %537 = vmatprep.subr.bf16.mxu0 0
        %538 = vmatpush1.bf16.msra.mxu0 0
        %539 = vmatprep.subr.bf16.mxu0 0
        %540 = vmatpush1.bf16.msra.mxu0 0
        %541 = vmatprep.subr.bf16.mxu0 0
        %542 = vmatpush1.bf16.msra.mxu0 0
        %543 = vmatprep.subr.bf16.mxu0 0
        %544 = vmatpush1.bf16.msra.mxu0 0
        %545 = vmatprep.subr.bf16.mxu0 0
        %546 = vmatpush1.bf16.msra.mxu0 0
        %547 = vmatprep.subr.bf16.mxu0 0
        %548 = vmatpush1.bf16.msra.mxu0 0
        %549 = vmatprep.subr.bf16.mxu0 0
        %550 = vmatpush1.bf16.msra.mxu0 0
        %551 = vmatprep.subr.bf16.mxu0 0
        %552 = vmatpush1.bf16.msra.mxu0 0
        %553 = vmatprep.subr.bf16.mxu0 0
        %554 = vmatpush1.bf16.msra.mxu0 0
        %555 = vmatprep.subr.bf16.mxu0 0
        %556 = vmatpush1.bf16.msra.mxu0 0
        %557 = vmatprep.subr.bf16.mxu0 0
        %558 = vmatpush1.bf16.msra.mxu0 0
        %559 = vmatprep.subr.bf16.mxu0 0
        %560 = vmatpush1.bf16.msra.mxu0 0
        %561 = vmatprep.subr.bf16.mxu0 0
        %562 = vmatpush1.bf16.msra.mxu0 0
        %563 = vmatprep.subr.bf16.mxu0 0
        %564 = vmatpush1.bf16.msra.mxu0 0
        %565 = vmatprep.subr.bf16.mxu0 0
        %566 = vmatpush1.bf16.msra.mxu0 0
        %567 = vmatprep.mubr.bf16.mxu0 0
        %568 = vmatmul.mubr.bf16.gmra.mrb[0].mxu0 %v530
        %v569 = vpop.f32.mrb[0].mxu0
        %v570 = vadd.f32 0.0, %v569
        %v571 = vpop.f32.mrb[0].mxu0
        %v572 = vpop.f32.mrb[0].mxu0
        %v573 = vpop.f32.mrb[0].mxu0
        %574 = vdwg.mxu0
        %s575 = scalar_lea.vmem %s199, 12 [#allocation2]
        %v576 = vld [vmem:[%s575] sm:$0xf]
        %v577 = vunpack.c.l.bf16 %v576
        %v578 = vmul.f32 %v577, 0.35355338
        %v579 = vpack.c.bf16 %v578, %v578
        %s580 = scalar_lea.vmem %s199, 28 [#allocation2]
        %v581 = vld [vmem:[%s580] sm:$0xf]
        %s582 = scalar_lea.vmem %s199, 44 [#allocation2]
        %v583 = vld [vmem:[%s582] sm:$0xf]
        %v585 = vsel %vm240, %v579, 0
        %v588 = vsel %vm240, %v581, 0
        %590 = vmatprep.subr.bf16.mxu0 0
        %591 = vmatpush1.bf16.xpose.msra.mxu0 %v588
        %592 = vmatprep.subr.bf16.mxu0 0
        %593 = vmatpush1.bf16.xpose.msra.mxu0 0
        %594 = vmatprep.subr.bf16.mxu0 0
        %595 = vmatpush1.bf16.xpose.msra.mxu0 0
        %596 = vmatprep.subr.bf16.mxu0 0
        %597 = vmatpush1.bf16.xpose.msra.mxu0 0
        %598 = vmatprep.subr.bf16.mxu0 0
        %599 = vmatpush1.bf16.xpose.msra.mxu0 0
        %600 = vmatprep.subr.bf16.mxu0 0
        %601 = vmatpush1.bf16.xpose.msra.mxu0 0
        %602 = vmatprep.subr.bf16.mxu0 0
        %603 = vmatpush1.bf16.xpose.msra.mxu0 0
        %604 = vmatprep.subr.bf16.mxu0 0
        %605 = vmatpush1.bf16.xpose.msra.mxu0 0
        %606 = vmatprep.subr.bf16.mxu0 0
        %607 = vmatpush1.bf16.xpose.msra.mxu0 0
        %608 = vmatprep.subr.bf16.mxu0 0
        %609 = vmatpush1.bf16.xpose.msra.mxu0 0
        %610 = vmatprep.subr.bf16.mxu0 0
        %611 = vmatpush1.bf16.xpose.msra.mxu0 0
        %612 = vmatprep.subr.bf16.mxu0 0
        %613 = vmatpush1.bf16.xpose.msra.mxu0 0
        %614 = vmatprep.subr.bf16.mxu0 0
        %615 = vmatpush1.bf16.xpose.msra.mxu0 0
        %616 = vmatprep.subr.bf16.mxu0 0
        %617 = vmatpush1.bf16.xpose.msra.mxu0 0
        %618 = vmatprep.subr.bf16.mxu0 0
        %619 = vmatpush1.bf16.xpose.msra.mxu0 0
        %620 = vmatprep.subr.bf16.mxu0 0
        %621 = vmatpush1.bf16.xpose.msra.mxu0 0
        %622 = vmatprep.mubr.bf16.mxu0 0
        %623 = vmatmul.mubr.bf16.gmra.mrb[0].mxu0 %v585
        %v624 = vpop.f32.mrb[0].mxu0
        %v625 = vadd.f32 0.0, %v624
        %v626 = vpop.f32.mrb[0].mxu0
        %v627 = vpop.f32.mrb[0].mxu0
        %v628 = vpop.f32.mrb[0].mxu0
        %629 = vdwg.mxu0
        %v630 = vsel %vm231, %v625, -1e+30
        %v631 = vsel %vm240, %v630, -inf
        %632 = vmax.xlane.f32.xlu0 %v631
        %v633 = vpop.xlane.xlu0 %632
        %v634 = vsub.f32 %v630, %v633
        %v635 = vmul.f32 %v634, 1.442695
        %v636 = vpow.pop %v635
        %v637 = vsel %vm240, %v636, 0.0
        %638 = vadd.xlane.f32.xlu0 %v637
        %v639 = vpop.xlane.xlu0 %638
        %v640 = vrcp.pop %v639
        %v641 = vmul.f32 %v636, %v640
        %v642 = vpack.c.bf16 %v641, %v641
        %v644 = vsel %vm240, %v642, 0
        %v647 = vsel %vm303, %v583, 0
        %649 = vmatprep.subr.bf16.mxu0 0
        %650 = vmatpush1.bf16.msra.mxu0 %v647
        %651 = vmatprep.subr.bf16.mxu0 0
        %652 = vmatpush1.bf16.msra.mxu0 0
        %653 = vmatprep.subr.bf16.mxu0 0
        %654 = vmatpush1.bf16.msra.mxu0 0
        %655 = vmatprep.subr.bf16.mxu0 0
        %656 = vmatpush1.bf16.msra.mxu0 0
        %657 = vmatprep.subr.bf16.mxu0 0
        %658 = vmatpush1.bf16.msra.mxu0 0
        %659 = vmatprep.subr.bf16.mxu0 0
        %660 = vmatpush1.bf16.msra.mxu0 0
        %661 = vmatprep.subr.bf16.mxu0 0
        %662 = vmatpush1.bf16.msra.mxu0 0
        %663 = vmatprep.subr.bf16.mxu0 0
        %664 = vmatpush1.bf16.msra.mxu0 0
        %665 = vmatprep.subr.bf16.mxu0 0
        %666 = vmatpush1.bf16.msra.mxu0 0
        %667 = vmatprep.subr.bf16.mxu0 0
        %668 = vmatpush1.bf16.msra.mxu0 0
        %669 = vmatprep.subr.bf16.mxu0 0
        %670 = vmatpush1.bf16.msra.mxu0 0
        %671 = vmatprep.subr.bf16.mxu0 0
        %672 = vmatpush1.bf16.msra.mxu0 0
        %673 = vmatprep.subr.bf16.mxu0 0
        %674 = vmatpush1.bf16.msra.mxu0 0
        %675 = vmatprep.subr.bf16.mxu0 0
        %676 = vmatpush1.bf16.msra.mxu0 0
        %677 = vmatprep.subr.bf16.mxu0 0
        %678 = vmatpush1.bf16.msra.mxu0 0
        %679 = vmatprep.subr.bf16.mxu0 0
        %680 = vmatpush1.bf16.msra.mxu0 0
        %681 = vmatprep.mubr.bf16.mxu0 0
        %682 = vmatmul.mubr.bf16.gmra.mrb[0].mxu0 %v644
        %v683 = vpop.f32.mrb[0].mxu0
        %v684 = vadd.f32 0.0, %v683
        %v685 = vpop.f32.mrb[0].mxu0
        %v686 = vpop.f32.mrb[0].mxu0
        %v687 = vpop.f32.mrb[0].mxu0
        %688 = vdwg.mxu0
        %690 = vrot.lane.b32.xlu0 %v456, 8
        %v691 = vpop.permute.xlu0 %690
        %694 = vrot.lane.b32.xlu0 %v570, 16
        %v695 = vpop.permute.xlu0 %694
        %698 = vrot.lane.b32.xlu0 %v684, 24
        %v699 = vpop.permute.xlu0 %698
        %v701 = vsel %vm240, %v342, %v691
        %vm702 = vcmask 130048
        %v703 = vsel %vm702, %v701, %v695
        %vm704 = vcmask 195584
        %v705 = vsel %vm704, %v703, %v699
        %v706 = vpack.c.bf16 %v705, %v705
        %vm707 = vcmask 257024
        %708 = vst.msk [vmem:[%s225] sm:$0xf] %vm707, %v706
        %p709 = scmp.lt.s32.totalorder %s16, 1
        %s710 = scalar_select %p709, %s16, 1
        %p711 = scmp.lt.s32.totalorder %s17, 0
        %s712 = scalar_select %p711, %s17, 0
        %s713 = sadd.s32 %s712, %s710
        %s714 = smul.addr %s713, 4
        %s715 = scalar_lea.vmem %s1, %s714
        // Predicated region
        $region66: #{transformer_forward.12} parent=60 // pred_check
          %p716 = pneg %p72
        $region67: #{transformer_forward.12} parent=60 // pred_check_branch
          %718 = sbr.rel (%p716) target = $region69
        $region68: #{transformer_forward.12} parent=60 // pred_region
          _
        $region69: #{transformer_forward.12} parent=60 // pred_fallthru
          _
      $region61: #{transformer_forward.12} parent=5 // pred_fallthru
        _
      %p719 = scmp.le.s32.totalorder 2, %s7
      // Predicated region
      $region70: #{transformer_forward.12} parent=5 // pred_check
        %p720 = pneg %p719
      $region71: #{transformer_forward.12} parent=5 // pred_check_branch
        %722 = sbr.rel (%p720) target = $region73
      $region72: #{transformer_forward.12} parent=5 // pred_region
        %s723 = ssub.s32 %s7, 2
        // Predicated region
        $region74: #{transformer_forward.12} parent=72 // pred_check
          %p724 = pneg %p78
        $region75: #{transformer_forward.12} parent=72 // pred_check_branch
          %726 = sbr.rel (%p724) target = $region77
        $region76: #{transformer_forward.12} parent=72 // pred_region
          %p727 = scmp.lt.s32.totalorder %s18, 1
          %s728 = scalar_select %p727, %s18, 1
          %p729 = scmp.lt.s32.totalorder %s19, 0
          %s730 = scalar_select %p729, %s19, 0
          %s731 = sadd.s32 %s730, %s728
          %s732 = smul.addr %s731, 4
          %s733 = scalar_lea.vmem %s1, %s732
        $region77: #{transformer_forward.12} parent=72 // pred_fallthru
          _
      $region73: #{transformer_forward.12} parent=5 // pred_fallthru
        _
    $region6: #{transformer_forward.12} parent=1 // loop_footer
      %s11 = sadd.s32 1, %s7
    $region7: #{transformer_forward.12} parent=1 // loop_footer_branch
      %6 = sbr.rel target = $region3
    $region8: #{transformer_forward.12} parent=1 // loop_exit
      _

// kernel: transformer_forward.13
$region0: #{transformer_forward.13}
  #allocation0 [shape = 'u32[]', space=smem, size = 0x4, offset = 0x4, fixed_abs, tag = 'smem constant byte address 0x4 - core index']
  #allocation1 [shape = 'u32[144,128]{1,0:T(1,128)}', space=vmem, size = 0x12000, scoped, tag = 'internal scratch']
  #allocation2 [shape = 'f32[16,32]{1,0:T(8,128)}', space=vmem, size = 0x2000, scoped, tag = 'scratch operand']
  %s0 = inlined_call_operand.vmem [shape: bf16[16,32], index: 0, kind: input, shape index: {}]
  %s1 = inlined_call_operand.vmem [shape: bf16[32,32], index: 1, kind: input, shape index: {}]
  %s2 = inlined_call_operand.vmem [shape: f32[1,32], index: 2, kind: input, shape index: {}]
  %s3 = inlined_call_operand.vmem [shape: f32[16,32], index: 3, kind: input, shape index: {}]
  %s4 = inlined_call_operand.vmem [shape: f32[16,32], index: 4, kind: output, shape index: {}]
  %s5 = sld [smem:[#allocation0]]
  $region34: #{transformer_forward.13} parent=0
    _
  %s7 = ssub.s32 1, %s5
  %s8 = scalar_select 0, %s7, %s5
  // Predicated region
  $region2: #{transformer_forward.13} parent=0 // pred_check
    _
  $region3: #{transformer_forward.13} parent=0 // pred_check_branch
    %10 = sbr.rel (0) target = $region5
  $region4: #{transformer_forward.13} parent=0 // pred_region
    _
  $region5: #{transformer_forward.13} parent=0 // pred_fallthru
    _
  // Predicated region
  $region6: #{transformer_forward.13} parent=0 // pred_check
    _
  $region7: #{transformer_forward.13} parent=0 // pred_check_branch
    %12 = sbr.rel (0) target = $region9
  $region8: #{transformer_forward.13} parent=0 // pred_region
    _
  $region9: #{transformer_forward.13} parent=0 // pred_fallthru
    _
  // Predicated region
  $region10: #{transformer_forward.13} parent=0 // pred_check
    _
  $region11: #{transformer_forward.13} parent=0 // pred_check_branch
    %14 = sbr.rel (0) target = $region13
  $region12: #{transformer_forward.13} parent=0 // pred_region
    _
  $region13: #{transformer_forward.13} parent=0 // pred_fallthru
    _
  // Predicated region
  $region14: #{transformer_forward.13} parent=0 // pred_check
    _
  $region15: #{transformer_forward.13} parent=0 // pred_check_branch
    %16 = sbr.rel (0) target = $region17
  $region16: #{transformer_forward.13} parent=0 // pred_region
    _
  $region17: #{transformer_forward.13} parent=0 // pred_fallthru
    _
  %p18 = scmp.eq.s32.totalorder 0, 0
  // Predicated region
  $region18: #{transformer_forward.13} parent=0 // pred_check
    %p19 = pneg %p18
  $region19: #{transformer_forward.13} parent=0 // pred_check_branch
    %21 = sbr.rel (%p19) target = $region21
  $region20: #{transformer_forward.13} parent=0 // pred_region
    %vm22 = vcmask 261120
    %23 = vst.msk [vmem:[#allocation2] sm:$0xff] %vm22, 0.0
    %24 = vst.msk [vmem:[#allocation2 + $0x8] sm:$0xff] %vm22, 0.0
  $region21: #{transformer_forward.13} parent=0 // pred_fallthru
    _
  %v25 = vld [vmem:[#allocation2] sm:$0xff]
  %v26 = vld [vmem:[#allocation2 + $0x8] sm:$0xff]
  %v27 = vld [vmem:[%s0] sm:$0xf]
  %v28 = vld [vmem:[%s0 + $0x4] sm:$0xf]
  %v29 = vld [vmem:[%s1] sm:$0xf]
  %v30 = vld [vmem:[%s1 + $0x4] sm:$0xf]
  %v31 = vld [vmem:[%s1 + $0x8] sm:$0xf]
  %v32 = vld [vmem:[%s1 + $0xc] sm:$0xf]
  %v35 = vunpack.c.l.b16 %v27
  %v36 = vunpack.c.l.b16 %v28
  %v37 = vpack.c.b16 %v36, %v35
  %v42 = vunpack.c.l.b16 %v29
  %v43 = vunpack.c.l.b16 %v30
  %v44 = vunpack.c.l.b16 %v31
  %v45 = vunpack.c.l.b16 %v32
  %v46 = vpack.c.b16 %v43, %v42
  %v47 = vpack.c.b16 %v45, %v44
  %vm50 = vcmask 261120
  %v52 = vsel %vm50, %v37, 0
  %54 = vmatprep.subr.bf16.mxu0 0
  %55 = vmatpush1.bf16.msra.mxu0 %v46
  %56 = vmatprep.subr.bf16.mxu0 0
  %57 = vmatpush1.bf16.msra.mxu0 %v47
  %58 = vmatprep.subr.bf16.mxu0 0
  %59 = vmatpush1.bf16.msra.mxu0 0
  %60 = vmatprep.subr.bf16.mxu0 0
  %61 = vmatpush1.bf16.msra.mxu0 0
  %62 = vmatprep.subr.bf16.mxu0 0
  %63 = vmatpush1.bf16.msra.mxu0 0
  %64 = vmatprep.subr.bf16.mxu0 0
  %65 = vmatpush1.bf16.msra.mxu0 0
  %66 = vmatprep.subr.bf16.mxu0 0
  %67 = vmatpush1.bf16.msra.mxu0 0
  %68 = vmatprep.subr.bf16.mxu0 0
  %69 = vmatpush1.bf16.msra.mxu0 0
  %70 = vmatprep.subr.bf16.mxu0 0
  %71 = vmatpush1.bf16.msra.mxu0 0
  %72 = vmatprep.subr.bf16.mxu0 0
  %73 = vmatpush1.bf16.msra.mxu0 0
  %74 = vmatprep.subr.bf16.mxu0 0
  %75 = vmatpush1.bf16.msra.mxu0 0
  %76 = vmatprep.subr.bf16.mxu0 0
  %77 = vmatpush1.bf16.msra.mxu0 0
  %78 = vmatprep.subr.bf16.mxu0 0
  %79 = vmatpush1.bf16.msra.mxu0 0
  %80 = vmatprep.subr.bf16.mxu0 0
  %81 = vmatpush1.bf16.msra.mxu0 0
  %82 = vmatprep.subr.bf16.mxu0 0
  %83 = vmatpush1.bf16.msra.mxu0 0
  %84 = vmatprep.subr.bf16.mxu0 0
  %85 = vmatpush1.bf16.msra.mxu0 0
  %86 = vmatprep.mubr.bf16.mxu0 0
  %87 = vmatmul.mubr.bf16.gmra.mrb[0].mxu0 %v52
  %v88 = vpop.f32.mrb[0].mxu0
  %v89 = vadd.f32 0.0, %v88
  %v90 = vpop.f32.mrb[0].mxu0
  %v91 = vpop.f32.mrb[0].mxu0
  %v92 = vadd.f32 0.0, %v91
  %v93 = vpop.f32.mrb[0].mxu0
  %94 = vdwg.mxu0
  %v95 = vadd.f32 %v25, %v89
  %v96 = vadd.f32 %v26, %v92
  %97 = vst.msk [vmem:[#allocation2] sm:$0xff] %vm50, %v95
  %98 = vst.msk [vmem:[#allocation2 + $0x8] sm:$0xff] %vm50, %v96
  // Predicated region
  $region22: #{transformer_forward.13} parent=0 // pred_check
    %p99 = pneg %p18
  $region23: #{transformer_forward.13} parent=0 // pred_check_branch
    %101 = sbr.rel (%p99) target = $region25
  $region24: #{transformer_forward.13} parent=0 // pred_region
    %v102 = vld [vmem:[#allocation2] sm:$0xff]
    %v103 = vld [vmem:[#allocation2 + $0x8] sm:$0xff]
    %v104 = vld [vmem:[%s2] sm:$0x1]
    %v106 = vlaneseq
    %v107 = vshrl.u32 %v106, 7
    %v108 = vsub.s32 0, %v107
    %v109 = vrot.slane %v104, %v108
    %v111 = vadd.f32 %v102, %v109
    %v112 = vadd.f32 %v103, %v109
    %v113 = vld [vmem:[%s3] sm:$0xff]
    %v114 = vld [vmem:[%s3 + $0x8] sm:$0xff]
    %v115 = vadd.f32 %v111, %v113
    %v116 = vadd.f32 %v112, %v114
    %117 = vst.msk [vmem:[%s4] sm:$0xff] %vm50, %v115
    %118 = vst.msk [vmem:[%s4 + $0x8] sm:$0xff] %vm50, %v116
  $region25: #{transformer_forward.13} parent=0 // pred_fallthru
    _
  // Predicated region
  $region26: #{transformer_forward.13} parent=0 // pred_check
    _
  $region27: #{transformer_forward.13} parent=0 // pred_check_branch
    %120 = sbr.rel (0) target = $region29
  $region28: #{transformer_forward.13} parent=0 // pred_region
    _
  $region29: #{transformer_forward.13} parent=0 // pred_fallthru
    _
  // Predicated region
  $region30: #{transformer_forward.13} parent=0 // pred_check
    _
  $region31: #{transformer_forward.13} parent=0 // pred_check_branch
    %122 = sbr.rel (0) target = $region33
  $region32: #{transformer_forward.13} parent=0 // pred_region
    _
  $region33: #{transformer_forward.13} parent=0 // pred_fallthru
    _

// kernel: transformer_forward.14
$region0: #{transformer_forward.14}
  #allocation0 [shape = 'u32[]', space=smem, size = 0x4, offset = 0x4, fixed_abs, tag = 'smem constant byte address 0x4 - core index']
  #allocation1 [shape = 'u32[144,128]{1,0:T(1,128)}', space=vmem, size = 0x12000, scoped, tag = 'internal scratch']
  %s0 = inlined_call_operand.vmem [shape: f32[16,32], index: 0, kind: input, shape index: {}]
  %s1 = inlined_call_operand.vmem [shape: f32[1,32], index: 1, kind: input, shape index: {}]
  %s2 = inlined_call_operand.vmem [shape: f32[1,32], index: 2, kind: input, shape index: {}]
  %s3 = inlined_call_operand.vmem [shape: bf16[32,128], index: 3, kind: input, shape index: {}]
  %s4 = inlined_call_operand.vmem [shape: f32[1,128], index: 4, kind: input, shape index: {}]
  %s5 = inlined_call_operand.vmem [shape: bf16[16,128], index: 5, kind: output, shape index: {}]
  %s6 = sld [smem:[#allocation0]]
  $region30: #{transformer_forward.14} parent=0
    _
  %s8 = ssub.s32 1, %s6
  %s9 = scalar_select 0, %s8, %s6
  // Predicated region
  $region2: #{transformer_forward.14} parent=0 // pred_check
    _
  $region3: #{transformer_forward.14} parent=0 // pred_check_branch
    %11 = sbr.rel (0) target = $region5
  $region4: #{transformer_forward.14} parent=0 // pred_region
    _
  $region5: #{transformer_forward.14} parent=0 // pred_fallthru
    _
  // Predicated region
  $region6: #{transformer_forward.14} parent=0 // pred_check
    _
  $region7: #{transformer_forward.14} parent=0 // pred_check_branch
    %13 = sbr.rel (0) target = $region9
  $region8: #{transformer_forward.14} parent=0 // pred_region
    _
  $region9: #{transformer_forward.14} parent=0 // pred_fallthru
    _
  // Predicated region
  $region10: #{transformer_forward.14} parent=0 // pred_check
    _
  $region11: #{transformer_forward.14} parent=0 // pred_check_branch
    %15 = sbr.rel (0) target = $region13
  $region12: #{transformer_forward.14} parent=0 // pred_region
    _
  $region13: #{transformer_forward.14} parent=0 // pred_fallthru
    _
  // Predicated region
  $region14: #{transformer_forward.14} parent=0 // pred_check
    _
  $region15: #{transformer_forward.14} parent=0 // pred_check_branch
    %17 = sbr.rel (0) target = $region17
  $region16: #{transformer_forward.14} parent=0 // pred_region
    _
  $region17: #{transformer_forward.14} parent=0 // pred_fallthru
    _
  // Predicated region
  $region18: #{transformer_forward.14} parent=0 // pred_check
    _
  $region19: #{transformer_forward.14} parent=0 // pred_check_branch
    %19 = sbr.rel (0) target = $region21
  $region20: #{transformer_forward.14} parent=0 // pred_region
    _
  $region21: #{transformer_forward.14} parent=0 // pred_fallthru
    _
  %v21 = vld [vmem:[%s0] sm:$0xff]
  %v22 = vld [vmem:[%s0 + $0x8] sm:$0xff]
  %vm23 = vcmask 261120
  %v24 = vsel %vm23, %v21, 0.0
  %25 = vadd.xlane.f32.xlu0 %v24
  %v26 = vpop.xlane.xlu0 %25
  %v27 = vsel %vm23, %v22, 0.0
  %28 = vadd.xlane.f32.xlu0 %v27
  %v29 = vpop.xlane.xlu0 %28
  %v30 = vrcp.pop 32.0
  %v31 = vmul.f32 %v26, %v30
  %v32 = vmul.f32 %v29, %v30
  %v33 = vsub.f32 %v21, %v31
  %v34 = vsub.f32 %v22, %v32
  %v35 = vmul.f32 %v33, %v33
  %v36 = vmul.f32 %v34, %v34
  %v37 = vsel %vm23, %v35, 0.0
  %38 = vadd.xlane.f32.xlu0 %v37
  %v39 = vpop.xlane.xlu0 %38
  %v40 = vsel %vm23, %v36, 0.0
  %41 = vadd.xlane.f32.xlu0 %v40
  %v42 = vpop.xlane.xlu0 %41
  %v43 = vmul.f32 %v39, %v30
  %v44 = vmul.f32 %v42, %v30
  %v45 = vadd.f32 %v43, 1e-05
  %v46 = vadd.f32 %v44, 1e-05
  %v47 = vrsqrt.pop %v45
  %v48 = vrsqrt.pop %v46
  %v49 = vmul.f32 %v33, %v47
  %v50 = vmul.f32 %v34, %v48
  %v51 = vld [vmem:[%s1] sm:$0x1]
  %v53 = vlaneseq
  %v54 = vshrl.u32 %v53, 7
  %v55 = vsub.s32 0, %v54
  %v56 = vrot.slane %v51, %v55
  %v58 = vmul.f32 %v49, %v56
  %v59 = vmul.f32 %v50, %v56
  %v60 = vld [vmem:[%s2] sm:$0x1]
  %v62 = vlaneseq
  %v63 = vshrl.u32 %v62, 7
  %v64 = vsub.s32 0, %v63
  %v65 = vrot.slane %v60, %v64
  %v67 = vadd.f32 %v58, %v65
  %v68 = vadd.f32 %v59, %v65
  %v69 = vpack.c.bf16 %v68, %v67
  %v70 = vld [vmem:[%s3] sm:$0xf]
  %v71 = vld [vmem:[%s3 + $0x4] sm:$0xf]
  %v72 = vld [vmem:[%s3 + $0x8] sm:$0xf]
  %v73 = vld [vmem:[%s3 + $0xc] sm:$0xf]
  %v74 = vld [vmem:[%s4] sm:$0x1]
  %v76 = vlaneseq
  %v77 = vshrl.u32 %v76, 7
  %v78 = vsub.s32 0, %v77
  %v79 = vrot.slane %v74, %v78
  %v85 = vunpack.c.l.b16 %v70
  %v86 = vunpack.c.l.b16 %v71
  %v87 = vunpack.c.l.b16 %v72
  %v88 = vunpack.c.l.b16 %v73
  %v89 = vpack.c.b16 %v86, %v85
  %v90 = vpack.c.b16 %v88, %v87
  %v94 = vsel %vm23, %v69, 0
  %96 = vmatprep.subr.bf16.mxu0 0
  %97 = vmatpush1.bf16.msra.mxu0 %v89
  %98 = vmatprep.subr.bf16.mxu0 0
  %99 = vmatpush1.bf16.msra.mxu0 %v90
  %100 = vmatprep.subr.bf16.mxu0 0
  %101 = vmatpush1.bf16.msra.mxu0 0
  %102 = vmatprep.subr.bf16.mxu0 0
  %103 = vmatpush1.bf16.msra.mxu0 0
  %104 = vmatprep.subr.bf16.mxu0 0
  %105 = vmatpush1.bf16.msra.mxu0 0
  %106 = vmatprep.subr.bf16.mxu0 0
  %107 = vmatpush1.bf16.msra.mxu0 0
  %108 = vmatprep.subr.bf16.mxu0 0
  %109 = vmatpush1.bf16.msra.mxu0 0
  %110 = vmatprep.subr.bf16.mxu0 0
  %111 = vmatpush1.bf16.msra.mxu0 0
  %112 = vmatprep.subr.bf16.mxu0 0
  %113 = vmatpush1.bf16.msra.mxu0 0
  %114 = vmatprep.subr.bf16.mxu0 0
  %115 = vmatpush1.bf16.msra.mxu0 0
  %116 = vmatprep.subr.bf16.mxu0 0
  %117 = vmatpush1.bf16.msra.mxu0 0
  %118 = vmatprep.subr.bf16.mxu0 0
  %119 = vmatpush1.bf16.msra.mxu0 0
  %120 = vmatprep.subr.bf16.mxu0 0
  %121 = vmatpush1.bf16.msra.mxu0 0
  %122 = vmatprep.subr.bf16.mxu0 0
  %123 = vmatpush1.bf16.msra.mxu0 0
  %124 = vmatprep.subr.bf16.mxu0 0
  %125 = vmatpush1.bf16.msra.mxu0 0
  %126 = vmatprep.subr.bf16.mxu0 0
  %127 = vmatpush1.bf16.msra.mxu0 0
  %128 = vmatprep.mubr.bf16.mxu0 0
  %129 = vmatmul.mubr.bf16.gmra.mrb[0].mxu0 %v94
  %v130 = vpop.f32.mrb[0].mxu0
  %v131 = vadd.f32 %v79, %v130
  %v132 = vpop.f32.mrb[0].mxu0
  %v133 = vpop.f32.mrb[0].mxu0
  %v134 = vadd.f32 %v79, %v133
  %v135 = vpop.f32.mrb[0].mxu0
  %136 = vdwg.mxu0
  %v137 = vmul.f32 %v131, 0.5
  %v138 = vmul.f32 %v134, 0.5
  %v139 = vmul.f32 %v131, 0.70710677
  %v140 = vmul.f32 %v134, 0.70710677
  %v141 = verf.f32.pop %v139
  %v142 = verf.f32.pop %v140
  %v143 = vadd.f32 %v141, 1.0
  %v144 = vadd.f32 %v142, 1.0
  %v145 = vmul.f32 %v137, %v143
  %v146 = vmul.f32 %v138, %v144
  %v147 = vpack.c.bf16 %v146, %v145
  %v149 = vunpack.c.l.b16 %v147
  %v150 = vunpack.c.h.b16 %v147
  %v151 = vpack.c.b16 %v149, %v149
  %v152 = vpack.c.b16 %v150, %v150
  %155 = vst [vmem:[%s5] sm:$0xf] %v151
  %156 = vst [vmem:[%s5 + $0x4] sm:$0xf] %v152
  // Predicated region
  $region22: #{transformer_forward.14} parent=0 // pred_check
    _
  $region23: #{transformer_forward.14} parent=0 // pred_check_branch
    %158 = sbr.rel (0) target = $region25
  $region24: #{transformer_forward.14} parent=0 // pred_region
    _
  $region25: #{transformer_forward.14} parent=0 // pred_fallthru
    _
  // Predicated region
  $region26: #{transformer_forward.14} parent=0 // pred_check
    _
  $region27: #{transformer_forward.14} parent=0 // pred_check_branch
    %160 = sbr.rel (0) target = $region29
  $region28: #{transformer_forward.14} parent=0 // pred_region
    _
  $region29: #{transformer_forward.14} parent=0 // pred_fallthru
    _

// kernel: transformer_forward.21
$region0: #{transformer_forward.21}
  #allocation0 [shape = 'u32[]', space=smem, size = 0x4, offset = 0x4, fixed_abs, tag = 'smem constant byte address 0x4 - core index']
  #allocation1 [shape = 'u32[144,128]{1,0:T(1,128)}', space=vmem, size = 0x12000, scoped, tag = 'internal scratch']
  %s0 = inlined_call_operand.vmem [shape: f32[16,32], index: 0, kind: input, shape index: {}]
  %s1 = inlined_call_operand.vmem [shape: f32[1,32], index: 1, kind: input, shape index: {}]
  %s2 = inlined_call_operand.vmem [shape: f32[1,32], index: 2, kind: input, shape index: {}]
  %s3 = inlined_call_operand.hbm [shape: f32[16,32], index: 3, kind: output, shape index: {}]
  %s4 = sld [smem:[#allocation0]]
  $region22: #{transformer_forward.21} parent=0
    _
  %s6 = ssub.s32 1, %s4
  %s7 = scalar_select 0, %s6, %s4
  $region1: #{transformer_forward.21} parent=0
    #allocation2 [shape = 'u8[8192]{0}', space=vmem, size = 0x2000, scoped, tag = 'output window, operand 0, single buffered']
    #allocation3 [shape = 's32[1]{0}', space=sflag, size = 0x4, scoped, tag = 'scoped memory for transformer_forward.21']
    %8 = vsyncpa [#allocation3], 0
    // Predicated region
    $region2: #{transformer_forward.21} parent=1 // pred_check
      _
    $region3: #{transformer_forward.21} parent=1 // pred_check_branch
      %10 = sbr.rel (0) target = $region5
    $region4: #{transformer_forward.21} parent=1 // pred_region
      _
    $region5: #{transformer_forward.21} parent=1 // pred_fallthru
      _
    // Predicated region
    $region6: #{transformer_forward.21} parent=1 // pred_check
      _
    $region7: #{transformer_forward.21} parent=1 // pred_check_branch
      %12 = sbr.rel (0) target = $region9
    $region8: #{transformer_forward.21} parent=1 // pred_region
      _
    $region9: #{transformer_forward.21} parent=1 // pred_fallthru
      _
    // Predicated region
    $region10: #{transformer_forward.21} parent=1 // pred_check
      _
    $region11: #{transformer_forward.21} parent=1 // pred_check_branch
      %14 = sbr.rel (0) target = $region13
    $region12: #{transformer_forward.21} parent=1 // pred_region
      _
    $region13: #{transformer_forward.21} parent=1 // pred_fallthru
      _
    %v15 = vld [vmem:[%s0] sm:$0xff]
    %v16 = vld [vmem:[%s0 + $0x8] sm:$0xff]
    %vm17 = vcmask 261120
    %v18 = vsel %vm17, %v15, 0.0
    %19 = vadd.xlane.f32.xlu0 %v18
    %v20 = vpop.xlane.xlu0 %19
    %v21 = vsel %vm17, %v16, 0.0
    %22 = vadd.xlane.f32.xlu0 %v21
    %v23 = vpop.xlane.xlu0 %22
    %v24 = vrcp.pop 32.0
    %v25 = vmul.f32 %v20, %v24
    %v26 = vmul.f32 %v23, %v24
    %v27 = vsub.f32 %v15, %v25
    %v28 = vsub.f32 %v16, %v26
    %v29 = vmul.f32 %v27, %v27
    %v30 = vmul.f32 %v28, %v28
    %v31 = vsel %vm17, %v29, 0.0
    %32 = vadd.xlane.f32.xlu0 %v31
    %v33 = vpop.xlane.xlu0 %32
    %v34 = vsel %vm17, %v30, 0.0
    %35 = vadd.xlane.f32.xlu0 %v34
    %v36 = vpop.xlane.xlu0 %35
    %v37 = vmul.f32 %v33, %v24
    %v38 = vmul.f32 %v36, %v24
    %v39 = vadd.f32 %v37, 1e-05
    %v40 = vadd.f32 %v38, 1e-05
    %v41 = vrsqrt.pop %v39
    %v42 = vrsqrt.pop %v40
    %v43 = vmul.f32 %v27, %v41
    %v44 = vmul.f32 %v28, %v42
    %v45 = vld [vmem:[%s1] sm:$0x1]
    %v47 = vlaneseq
    %v48 = vshrl.u32 %v47, 7
    %v49 = vsub.s32 0, %v48
    %v50 = vrot.slane %v45, %v49
    %v52 = vmul.f32 %v43, %v50
    %v53 = vmul.f32 %v44, %v50
    %v54 = vld [vmem:[%s2] sm:$0x1]
    %v56 = vlaneseq
    %v57 = vshrl.u32 %v56, 7
    %v58 = vsub.s32 0, %v57
    %v59 = vrot.slane %v54, %v58
    %v61 = vadd.f32 %v52, %v59
    %v62 = vadd.f32 %v53, %v59
    %63 = vst.msk [vmem:[#allocation2] sm:$0xff] %vm17, %v61
    %64 = vst.msk [vmem:[#allocation2 + $0x8] sm:$0xff] %vm17, %v62
    // Predicated region
    $region14: #{transformer_forward.21} parent=1 // pred_check
      _
    $region15: #{transformer_forward.21} parent=1 // pred_check_branch
      %66 = sbr.rel (0) target = $region17
    $region16: #{transformer_forward.21} parent=1 // pred_region
      %s68 = ssub.s32 256, 256
      %69 = vsyncadd [#allocation3], %s68
      %s70 = sshll.u32 [#allocation2], 4
      %s71 = int_to_ptr.vmem [resolvable:$true] %s70
      %76 = dma.vmem_to_hbm [thread:$0]  %s71, 256, %s3, [#allocation3], 128, 128, 8
    $region17: #{transformer_forward.21} parent=1 // pred_fallthru
      _
    // Predicated region
    $region18: #{transformer_forward.21} parent=1 // pred_check
      _
    $region19: #{transformer_forward.21} parent=1 // pred_check_branch
      %78 = sbr.rel (0) target = $region21
    $region20: #{transformer_forward.21} parent=1 // pred_region
      %79 = dma.done [#allocation3], 256
    $region21: #{transformer_forward.21} parent=1 // pred_fallthru
      _
    %80 = vsyncpa [#allocation3], 1

// kernel: transformer_forward.15
$region0: #{transformer_forward.15}
  #allocation0 [shape = 'u32[]', space=smem, size = 0x4, offset = 0x4, fixed_abs, tag = 'smem constant byte address 0x4 - core index']
  #allocation1 [shape = 'u32[144,128]{1,0:T(1,128)}', space=vmem, size = 0x12000, scoped, tag = 'internal scratch']
  #allocation2 [shape = 'f32[16,32]{1,0:T(8,128)}', space=vmem, size = 0x2000, scoped, tag = 'scratch operand']
  %s0 = inlined_call_operand.vmem [shape: bf16[16,128], index: 0, kind: input, shape index: {}]
  %s1 = inlined_call_operand.vmem [shape: bf16[128,32], index: 1, kind: input, shape index: {}]
  %s2 = inlined_call_operand.vmem [shape: f32[1,32], index: 2, kind: input, shape index: {}]
  %s3 = inlined_call_operand.vmem [shape: f32[16,32], index: 3, kind: input, shape index: {}]
  %s4 = inlined_call_operand.vmem [shape: f32[16,32], index: 4, kind: output, shape index: {}]
  %s5 = sld [smem:[#allocation0]]
  $region34: #{transformer_forward.15} parent=0
    _
  %s7 = ssub.s32 1, %s5
  %s8 = scalar_select 0, %s7, %s5
  // Predicated region
  $region2: #{transformer_forward.15} parent=0 // pred_check
    _
  $region3: #{transformer_forward.15} parent=0 // pred_check_branch
    %10 = sbr.rel (0) target = $region5
  $region4: #{transformer_forward.15} parent=0 // pred_region
    _
  $region5: #{transformer_forward.15} parent=0 // pred_fallthru
    _
  // Predicated region
  $region6: #{transformer_forward.15} parent=0 // pred_check
    _
  $region7: #{transformer_forward.15} parent=0 // pred_check_branch
    %12 = sbr.rel (0) target = $region9
  $region8: #{transformer_forward.15} parent=0 // pred_region
    _
  $region9: #{transformer_forward.15} parent=0 // pred_fallthru
    _
  // Predicated region
  $region10: #{transformer_forward.15} parent=0 // pred_check
    _
  $region11: #{transformer_forward.15} parent=0 // pred_check_branch
    %14 = sbr.rel (0) target = $region13
  $region12: #{transformer_forward.15} parent=0 // pred_region
    _
  $region13: #{transformer_forward.15} parent=0 // pred_fallthru
    _
  // Predicated region
  $region14: #{transformer_forward.15} parent=0 // pred_check
    _
  $region15: #{transformer_forward.15} parent=0 // pred_check_branch
    %16 = sbr.rel (0) target = $region17
  $region16: #{transformer_forward.15} parent=0 // pred_region
    _
  $region17: #{transformer_forward.15} parent=0 // pred_fallthru
    _
  %p18 = scmp.eq.s32.totalorder 0, 0
  // Predicated region
  $region18: #{transformer_forward.15} parent=0 // pred_check
    %p19 = pneg %p18
  $region19: #{transformer_forward.15} parent=0 // pred_check_branch
    %21 = sbr.rel (%p19) target = $region21
  $region20: #{transformer_forward.15} parent=0 // pred_region
    %vm22 = vcmask 261120
    %23 = vst.msk [vmem:[#allocation2] sm:$0xff] %vm22, 0.0
    %24 = vst.msk [vmem:[#allocation2 + $0x8] sm:$0xff] %vm22, 0.0
  $region21: #{transformer_forward.15} parent=0 // pred_fallthru
    _
  %v25 = vld [vmem:[#allocation2] sm:$0xff]
  %v26 = vld [vmem:[#allocation2 + $0x8] sm:$0xff]
  %v27 = vld [vmem:[%s0] sm:$0xf]
  %v28 = vld [vmem:[%s0 + $0x4] sm:$0xf]
  %v29 = vld [vmem:[%s1] sm:$0xf]
  %v30 = vld [vmem:[%s1 + $0x4] sm:$0xf]
  %v31 = vld [vmem:[%s1 + $0x8] sm:$0xf]
  %v32 = vld [vmem:[%s1 + $0xc] sm:$0xf]
  %v33 = vld [vmem:[%s1 + $0x10] sm:$0xf]
  %v34 = vld [vmem:[%s1 + $0x14] sm:$0xf]
  %v35 = vld [vmem:[%s1 + $0x18] sm:$0xf]
  %v36 = vld [vmem:[%s1 + $0x1c] sm:$0xf]
  %v37 = vld [vmem:[%s1 + $0x20] sm:$0xf]
  %v38 = vld [vmem:[%s1 + $0x24] sm:$0xf]
  %v39 = vld [vmem:[%s1 + $0x28] sm:$0xf]
  %v40 = vld [vmem:[%s1 + $0x2c] sm:$0xf]
  %v41 = vld [vmem:[%s1 + $0x30] sm:$0xf]
  %v42 = vld [vmem:[%s1 + $0x34] sm:$0xf]
  %v43 = vld [vmem:[%s1 + $0x38] sm:$0xf]
  %v44 = vld [vmem:[%s1 + $0x3c] sm:$0xf]
  %v47 = vunpack.c.l.b16 %v27
  %v48 = vunpack.c.l.b16 %v28
  %v49 = vpack.c.b16 %v48, %v47
  %v67 = vunpack.c.l.b16 %v29
  %v68 = vunpack.c.l.b16 %v30
  %v69 = vunpack.c.l.b16 %v31
  %v70 = vunpack.c.l.b16 %v32
  %v71 = vunpack.c.l.b16 %v33
  %v72 = vunpack.c.l.b16 %v34
  %v73 = vunpack.c.l.b16 %v35
  %v74 = vunpack.c.l.b16 %v36
  %v75 = vunpack.c.l.b16 %v37
  %v76 = vunpack.c.l.b16 %v38
  %v77 = vunpack.c.l.b16 %v39
  %v78 = vunpack.c.l.b16 %v40
  %v79 = vunpack.c.l.b16 %v41
  %v80 = vunpack.c.l.b16 %v42
  %v81 = vunpack.c.l.b16 %v43
  %v82 = vunpack.c.l.b16 %v44
  %v83 = vpack.c.b16 %v68, %v67
  %v84 = vpack.c.b16 %v70, %v69
  %v85 = vpack.c.b16 %v72, %v71
  %v86 = vpack.c.b16 %v74, %v73
  %v87 = vpack.c.b16 %v76, %v75
  %v88 = vpack.c.b16 %v78, %v77
  %v89 = vpack.c.b16 %v80, %v79
  %v90 = vpack.c.b16 %v82, %v81
  %99 = vmatprep.subr.bf16.mxu0 0
  %100 = vmatpush1.bf16.msra.mxu0 %v83
  %101 = vmatprep.subr.bf16.mxu0 0
  %102 = vmatpush1.bf16.msra.mxu0 %v84
  %103 = vmatprep.subr.bf16.mxu0 0
  %104 = vmatpush1.bf16.msra.mxu0 %v85
  %105 = vmatprep.subr.bf16.mxu0 0
  %106 = vmatpush1.bf16.msra.mxu0 %v86
  %107 = vmatprep.subr.bf16.mxu0 0
  %108 = vmatpush1.bf16.msra.mxu0 %v87
  %109 = vmatprep.subr.bf16.mxu0 0
  %110 = vmatpush1.bf16.msra.mxu0 %v88
  %111 = vmatprep.subr.bf16.mxu0 0
  %112 = vmatpush1.bf16.msra.mxu0 %v89
  %113 = vmatprep.subr.bf16.mxu0 0
  %114 = vmatpush1.bf16.msra.mxu0 %v90
  %115 = vmatprep.subr.bf16.mxu0 0
  %116 = vmatpush1.bf16.msra.mxu0 0
  %117 = vmatprep.subr.bf16.mxu0 0
  %118 = vmatpush1.bf16.msra.mxu0 0
  %119 = vmatprep.subr.bf16.mxu0 0
  %120 = vmatpush1.bf16.msra.mxu0 0
  %121 = vmatprep.subr.bf16.mxu0 0
  %122 = vmatpush1.bf16.msra.mxu0 0
  %123 = vmatprep.subr.bf16.mxu0 0
  %124 = vmatpush1.bf16.msra.mxu0 0
  %125 = vmatprep.subr.bf16.mxu0 0
  %126 = vmatpush1.bf16.msra.mxu0 0
  %127 = vmatprep.subr.bf16.mxu0 0
  %128 = vmatpush1.bf16.msra.mxu0 0
  %129 = vmatprep.subr.bf16.mxu0 0
  %130 = vmatpush1.bf16.msra.mxu0 0
  %131 = vmatprep.mubr.bf16.mxu0 0
  %132 = vmatmul.mubr.bf16.gmra.mrb[0].mxu0 %v49
  %v133 = vpop.f32.mrb[0].mxu0
  %v134 = vadd.f32 0.0, %v133
  %v135 = vpop.f32.mrb[0].mxu0
  %v136 = vpop.f32.mrb[0].mxu0
  %v137 = vadd.f32 0.0, %v136
  %v138 = vpop.f32.mrb[0].mxu0
  %139 = vdwg.mxu0
  %v140 = vadd.f32 %v25, %v134
  %v141 = vadd.f32 %v26, %v137
  %vm142 = vcmask 261120
  %143 = vst.msk [vmem:[#allocation2] sm:$0xff] %vm142, %v140
  %144 = vst.msk [vmem:[#allocation2 + $0x8] sm:$0xff] %vm142, %v141
  // Predicated region
  $region22: #{transformer_forward.15} parent=0 // pred_check
    %p145 = pneg %p18
  $region23: #{transformer_forward.15} parent=0 // pred_check_branch
    %147 = sbr.rel (%p145) target = $region25
  $region24: #{transformer_forward.15} parent=0 // pred_region
    %v148 = vld [vmem:[#allocation2] sm:$0xff]
    %v149 = vld [vmem:[#allocation2 + $0x8] sm:$0xff]
    %v150 = vld [vmem:[%s2] sm:$0x1]
    %v152 = vlaneseq
    %v153 = vshrl.u32 %v152, 7
    %v154 = vsub.s32 0, %v153
    %v155 = vrot.slane %v150, %v154
    %v157 = vadd.f32 %v148, %v155
    %v158 = vadd.f32 %v149, %v155
    %v159 = vld [vmem:[%s3] sm:$0xff]
    %v160 = vld [vmem:[%s3 + $0x8] sm:$0xff]
    %v161 = vadd.f32 %v157, %v159
    %v162 = vadd.f32 %v158, %v160
    %163 = vst.msk [vmem:[%s4] sm:$0xff] %vm142, %v161
    %164 = vst.msk [vmem:[%s4 + $0x8] sm:$0xff] %vm142, %v162
  $region25: #{transformer_forward.15} parent=0 // pred_fallthru
    _
  // Predicated region
  $region26: #{transformer_forward.15} parent=0 // pred_check
    _
  $region27: #{transformer_forward.15} parent=0 // pred_check_branch
    %166 = sbr.rel (0) target = $region29
  $region28: #{transformer_forward.15} parent=0 // pred_region
    _
  $region29: #{transformer_forward.15} parent=0 // pred_fallthru
    _
  // Predicated region
  $region30: #{transformer_forward.15} parent=0 // pred_check
    _
  $region31: #{transformer_forward.15} parent=0 // pred_check_branch
    %168 = sbr.rel (0) target = $region33
  $region32: #{transformer_forward.15} parent=0 // pred_region
    _
  $region33: #{transformer_forward.15} parent=0 // pred_fallthru
    _

</llo_original>
